<compile_context>
chip_gen: v7x
topology: tpu7x:2x2x1
jax: 0.10.0
libtpu: 0.0.40
codegen_flags: <defaults>
</compile_context>

<pallas_src>
import functools
import math

import jax
import jax.numpy as jnp
from jax.experimental import pallas as pl
from jax.experimental.pallas import tpu as pltpu

EPS = 1e-5     # nn.BatchNorm2d default eps
LANE = 128


def _round_up(x, m):
    return (x + m - 1) // m * m


# ---------------------------------------------------------------------------
# Kernels
# ---------------------------------------------------------------------------
def _conv1_kernel(xp_ref, w_ref, o_ref, *, H):
    """Layer-1 conv for one image: one concatenated-K banded matmul.

    xp_ref: (1, HP, K1) bf16   zero halo rows, lanes = (w, ci) + zero pad
    w_ref:  (3*K1, N1) bf16    dy-concatenated banded weights
    o_ref:  (1, H, N1)  f32    lanes = (w, co)
    """
    xcat = jnp.concatenate(
        [xp_ref[0, dy:dy + H, :] for dy in range(3)], axis=-1)       # (H, 3*K1)
    o_ref[...] = jnp.dot(xcat, w_ref[...],
                         preferred_element_type=jnp.float32)[None]


def _bn_fold(acc, pool, gamma_l, beta_l, count):
    """Global train-mode BN folded to per-lane scale/shift.

    acc:   (M, L) f32 conv output, lane layout (w, c) interleaved.
    pool:  (L, L) 0/1 matrix summing lanes of equal channel (0 on pad lanes).
    """
    t = jnp.sum(jnp.dot(acc, pool, preferred_element_type=jnp.float32),
                axis=0, keepdims=True)                                # (1, L)
    u = jnp.sum(jnp.dot(acc * acc, pool, preferred_element_type=jnp.float32),
                axis=0, keepdims=True)
    mean = t / count
    var = jnp.maximum(u / count - mean * mean, 0.0)
    scale = gamma_l * jax.lax.rsqrt(var + EPS)
    shift = beta_l - mean * scale
    return scale, shift


def _fused_tail_kernel(a1_ref, w2_ref, p1_ref, bn1_ref, p2_ref, bn2_ref,
                       o_ref, xp2_ref, *, N, H, W):
    """Layer-1 BN+ReLU, halo re-pad in VMEM, layer-2 conv, layer-2 BN+ReLU.

    a1_ref:  (N, H, N1) f32   raw layer-1 conv accumulator (whole batch)
    w2_ref:  (3*N1, N2) bf16  dy-concatenated layer-2 banded weights
    p*_ref:  (Nk, Nk)  f32    per-channel pooling matrices
    bn*_ref: (2, Nk)   f32    [gamma; beta] tiled over w (0 on pad lanes)
    o_ref:   (N, H, N2) f32   final activation (pad lanes = 0)
    xp2_ref: (N, HP, N1) bf16 scratch: halo-padded layer-2 input
    """
    count = float(N * H * W)
    K2 = a1_ref.shape[2]

    # ---- layer 1: global stats over the whole batch, folded affine + ReLU.
    acc1 = a1_ref[...].reshape(N * H, K2)
    bn1 = bn1_ref[...]
    s1, b1 = _bn_fold(acc1, p1_ref[...], bn1[0:1], bn1[1:2], count)
    y1 = jnp.maximum(acc1 * s1 + b1, 0.0)

    # ---- re-pad (zero halo rows) in VMEM and run the layer-2 banded conv.
    xp2_ref[...] = jnp.zeros_like(xp2_ref)
    xp2_ref[:, 1:H + 1, :] = y1.reshape(N, H, K2).astype(xp2_ref.dtype)
    xcat = jnp.concatenate(
        [xp2_ref[:, dy:dy + H, :].reshape(N * H, K2) for dy in range(3)],
        axis=-1)                                                      # (N*H, 3*K2)
    acc2 = jnp.dot(xcat, w2_ref[...], preferred_element_type=jnp.float32)

    # ---- layer 2: global stats, folded affine + ReLU (pad lanes stay 0).
    bn2 = bn2_ref[...]
    s2, b2 = _bn_fold(acc2, p2_ref[...], bn2[0:1], bn2[1:2], count)
    o_ref[...] = jnp.maximum(acc2 * s2 + b2, 0.0).reshape(N, H, -1)


# ---------------------------------------------------------------------------
# Wrapper glue (weight/layout prep only)
# ---------------------------------------------------------------------------
def _banded_weight(w_oihw, W, k_pad, n_pad):
    """(Cout, Cin, 3, 3) -> (3*k_pad, n_pad) dy-concatenated band matrix.

    band[dy*k_pad + w_in*Cin + ci, w_out*Cout + co] = w[co, ci, dy, w_in-w_out+1]
    Taps falling outside [0,3) are simply absent == implicit zero W padding.
    """
    Cout, Cin = w_oihw.shape[0], w_oihw.shape[1]
    wt = jnp.transpose(w_oihw, (2, 3, 1, 0)).astype(jnp.float32)   # (dy,dx,ci,co)
    slabs = []
    for dy in range(3):
        blk = jnp.zeros((W, Cin, W, Cout), jnp.float32)
        for dx in range(3):
            sel = jnp.eye(W, W, k=1 - dx, dtype=jnp.float32)       # sel[w_in, w_out]
            blk = blk + sel[:, None, :, None] * wt[dy, dx][None, :, None, :]
        slab = blk.reshape(W * Cin, W * Cout)
        slab = jnp.pad(slab, ((0, k_pad - W * Cin), (0, n_pad - W * Cout)))
        slabs.append(slab)
    return jnp.concatenate(slabs, axis=0)


def _pool_matrix(n_pad, n_real, C):
    """0/1 (n_pad, n_pad) matrix pooling lanes of equal channel over w."""
    l = jnp.arange(n_pad)
    same_c = (l[:, None] % C) == (l[None, :] % C)
    real = (l[:, None] < n_real) & (l[None, :] < n_real)
    return (same_c & real).astype(jnp.float32)


def _bn_lane_vecs(gamma, beta, W, n_pad):
    C = gamma.shape[0]
    g = jnp.pad(jnp.tile(gamma, W), (0, n_pad - W * C))
    b = jnp.pad(jnp.tile(beta, W), (0, n_pad - W * C))
    return jnp.stack([g, b], axis=0).astype(jnp.float32)            # (2, n_pad)


def conv_past_future_forward(params, x_nchw):
    """Forward pass of Conv_Past_Future. Input/output are NCHW like PyTorch."""
    N, Cin, H, W = x_nchw.shape
    C1 = params["w1"].shape[0]
    C2 = params["w2"].shape[0]

    K1 = _round_up(W * Cin, LANE)       # layer-1 input lanes (per dy)
    N1 = _round_up(W * C1, LANE)        # layer-1 out lanes == layer-2 in lanes
    N2 = _round_up(W * C2, LANE)        # layer-2 out lanes
    HP = _round_up(H + 2, 16)           # bf16 sublane tile

    # Input glue (one small fusion): NCHW -> (N, HP, K1) bf16, zero halo rows
    # and zero lane padding.
    xp1 = jnp.transpose(x_nchw, (0, 2, 3, 1)).reshape(N, H, W * Cin)
    xp1 = jnp.pad(xp1, ((0, 0), (1, HP - H - 1), (0, K1 - W * Cin)))
    xp1 = xp1.astype(jnp.bfloat16)

    wb1 = _banded_weight(params["w1"], W, K1, N1).astype(jnp.bfloat16)
    wb2 = _banded_weight(params["w2"], W, N1, N2).astype(jnp.bfloat16)
    p1 = _pool_matrix(N1, W * C1, C1)
    p2 = _pool_matrix(N2, W * C2, C2)
    bn1 = _bn_lane_vecs(params["g1"], params["be1"], W, N1)
    bn2 = _bn_lane_vecs(params["g2"], params["be2"], W, N2)

    # Launch 1: layer-1 conv, one image per step ("parallel" -> v7x megacore).
    a1 = pl.pallas_call(
        functools.partial(_conv1_kernel, H=H),
        out_shape=jax.ShapeDtypeStruct((N, H, N1), jnp.float32),
        grid=(N,),
        in_specs=[pl.BlockSpec((1, HP, K1), lambda n: (n, 0, 0)),
                  pl.BlockSpec((3 * K1, N1), lambda n: (0, 0))],
        out_specs=pl.BlockSpec((1, H, N1), lambda n: (n, 0, 0)),
        compiler_params=pltpu.CompilerParams(
            dimension_semantics=("parallel",)),
    )(xp1, wb1)

    # Launch 2: whole batch in one step (global train-mode BN) — layer-1
    # BN+ReLU, halo re-pad, layer-2 conv + BN + ReLU, lane-dense final store.
    out = pl.pallas_call(
        functools.partial(_fused_tail_kernel, N=N, H=H, W=W),
        out_shape=jax.ShapeDtypeStruct((N, H, N2), jnp.float32),
        grid=(1,),
        in_specs=[pl.BlockSpec((N, H, N1), lambda i: (0, 0, 0)),
                  pl.BlockSpec((3 * N1, N2), lambda i: (0, 0)),
                  pl.BlockSpec((N1, N1), lambda i: (0, 0)),
                  pl.BlockSpec((2, N1), lambda i: (0, 0)),
                  pl.BlockSpec((N2, N2), lambda i: (0, 0)),
                  pl.BlockSpec((2, N2), lambda i: (0, 0))],
        out_specs=pl.BlockSpec((N, H, N2), lambda i: (0, 0, 0)),
        scratch_shapes=[pltpu.VMEM((N, HP, N1), jnp.bfloat16)],
        compiler_params=pltpu.CompilerParams(
            dimension_semantics=("arbitrary",)),
    )(a1, wb2, p1, bn1, p2, bn2)

    # Output glue: drop dead lanes, back to NCHW (one small fusion).
    out = out[:, :, : W * C2].reshape(N, H, W, C2)
    return jnp.transpose(out, (0, 3, 1, 2))


# ---------------------------------------------------------------------------
# Parameters & reference
# ---------------------------------------------------------------------------
def init_params(key, in_channel, out_channel):
    """Deterministic synthetic parameters matching the module's shapes."""
    middle = 2 ** (int(math.log2(in_channel)) + 1)
    ks = jax.random.split(key, 8)

    def conv_w(k, co, ci):
        bound = 1.0 / math.sqrt(ci * 9)
        return jax.random.uniform(k, (co, ci, 3, 3), jnp.float32, -bound, bound)

    def conv_b(k, co, ci):
        bound = 1.0 / math.sqrt(ci * 9)
        return jax.random.uniform(k, (co,), jnp.float32, -bound, bound)

    params = dict(
        w1=conv_w(ks[0], middle, in_channel),
        b1=conv_b(ks[1], middle, in_channel),     # used only by the reference
        g1=1.0 + 0.1 * jax.random.normal(ks[2], (middle,), jnp.float32),
        be1=0.1 * jax.random.normal(ks[3], (middle,), jnp.float32),
        w2=conv_w(ks[4], out_channel, middle),
        b2=conv_b(ks[5], out_channel, middle),    # used only by the reference
        g2=1.0 + 0.1 * jax.random.normal(ks[6], (out_channel,), jnp.float32),
        be2=0.1 * jax.random.normal(ks[7], (out_channel,), jnp.float32),
    )
    return params, middle


def reference_forward(params, x_nchw, conv_dtype=jnp.float32):
    """Pure-JAX reference (lax conv + train-mode BN + ReLU), bias included."""
    def block(x, w, b, g, be):
        y = jax.lax.conv_general_dilated(
            x.astype(conv_dtype), w.astype(conv_dtype), (1, 1), "SAME",
            dimension_numbers=("NCHW", "OIHW", "NCHW"),
            preferred_element_type=jnp.float32)
        y = y + b[None, :, None, None]
        mean = jnp.mean(y, axis=(0, 2, 3), keepdims=True)
        var = jnp.mean((y - mean) ** 2, axis=(0, 2, 3), keepdims=True)
        y = (y - mean) * jax.lax.rsqrt(var + EPS)
        y = y * g[None, :, None, None] + be[None, :, None, None]
        return jnp.maximum(y, 0.0)

    h = block(x_nchw, params["w1"], params["b1"], params["g1"], params["be1"])
    return block(h, params["w2"], params["b2"], params["g2"], params["be2"])


if __name__ == "__main__":
    key = jax.random.PRNGKey(0)
    kx, kp = jax.random.split(key)

    in_channel, out_channel = 4, 4          # middle_channel = 8
    N, H, W = 2, 16, 16
    x = jax.random.normal(kx, (N, in_channel, H, W), jnp.float32)

    params, middle = init_params(kp, in_channel, out_channel)

    fwd = jax.jit(conv_past_future_forward)
    out = jax.block_until_ready(fwd(params, x))
    assert out.shape == (N, out_channel, H, W), out.shape

    # Tight check against a bf16-conv reference (same MXU precision as kernel),
    # loose check against the full-f32 reference (bf16 input quantization).
    ref_bf16 = reference_forward(params, x, conv_dtype=jnp.bfloat16)
    ref_f32 = reference_forward(params, x, conv_dtype=jnp.float32)
    err_bf16 = float(jnp.max(jnp.abs(out - ref_bf16)))
    err_f32 = float(jnp.max(jnp.abs(out - ref_f32)))
    assert err_bf16 < 1e-2, f"max abs error vs bf16 reference: {err_bf16}"
    assert err_f32 < 1e-1, f"max abs error vs f32 reference: {err_f32}"

    print("KERNEL_OK")
</pallas_src>

<mosaic_0001>
module attributes {stable_mosaic.version = 11 : i64} {
  func.func @_conv1_kernel(%arg0: i32, %arg1: memref<1x32x128xbf16, #tpu.memory_space<vmem>>, %arg2: memref<384x128xbf16, #tpu.memory_space<vmem>>, %arg3: memref<1x16x128xf32, #tpu.memory_space<vmem>>) attributes {dimension_semantics = [#tpu.dimension_semantics<parallel>], iteration_bounds = array<i64: 2>, scalar_prefetch = 0 : i64, scratch_operands = 0 : i64, tpu.core_type = #tpu.core_type<tc>, window_params = [{transform_indices = @transform_0, window_bounds = array<i64: 1, 32, 128>}, {pipeline_mode = #tpu.pipeline_mode<synchronous>, transform_indices = @transform_1, window_bounds = array<i64: 384, 128>}, {transform_indices = @transform_2, window_bounds = array<i64: 1, 16, 128>}]} {
    %c0 = arith.constant 0 : index
    %c0_0 = arith.constant 0 : index
    %c0_1 = arith.constant 0 : index
    %0 = vector.load %arg1[%c0, %c0_0, %c0_1] : memref<1x32x128xbf16, #tpu.memory_space<vmem>>, vector<1x16x128xbf16>
    %1 = vector.shape_cast %0 : vector<1x16x128xbf16> to vector<16x128xbf16>
    %c0_2 = arith.constant 0 : index
    %c1 = arith.constant 1 : index
    %c0_3 = arith.constant 0 : index
    %2 = vector.load %arg1[%c0_2, %c1, %c0_3] : memref<1x32x128xbf16, #tpu.memory_space<vmem>>, vector<1x16x128xbf16>
    %3 = vector.shape_cast %2 : vector<1x16x128xbf16> to vector<16x128xbf16>
    %c0_4 = arith.constant 0 : index
    %c2 = arith.constant 2 : index
    %c0_5 = arith.constant 0 : index
    %4 = vector.load %arg1[%c0_4, %c2, %c0_5] : memref<1x32x128xbf16, #tpu.memory_space<vmem>>, vector<1x16x128xbf16>
    %5 = vector.shape_cast %4 : vector<1x16x128xbf16> to vector<16x128xbf16>
    %6 = tpu.concatenate %1, %3, %5 in 1 : vector<16x128xbf16>, vector<16x128xbf16>, vector<16x128xbf16> -> vector<16x384xbf16>
    %c0_6 = arith.constant 0 : index
    %c0_7 = arith.constant 0 : index
    %7 = vector.load %arg2[%c0_6, %c0_7] : memref<384x128xbf16, #tpu.memory_space<vmem>>, vector<384x128xbf16>
    %cst = arith.constant dense<0.000000e+00> : vector<16x128xf32>
    %8 = tpu.matmul %6, %7, %cst {dimension_numbers = #tpu.dot_dimension_numbers<[1], [0], [0], [1], [0, 0, 1, 1], [], []>} : vector<16x384xbf16>, vector<384x128xbf16>, vector<16x128xf32> -> vector<16x128xf32>
    %9 = vector.shape_cast %8 : vector<16x128xf32> to vector<1x16x128xf32>
    %c0_8 = arith.constant 0 : index
    %c0_9 = arith.constant 0 : index
    %c0_10 = arith.constant 0 : index
    %10 = vector.load %arg3[%c0_8, %c0_9, %c0_10] : memref<1x16x128xf32, #tpu.memory_space<vmem>>, vector<1x16x128xf32>
    tpu.vector_store %arg3[%c0_8, %c0_9, %c0_10], %9 {strides = array<i32>} : memref<1x16x128xf32, #tpu.memory_space<vmem>>, vector<1x16x128xf32>,
    return
  }
  func.func @transform_0(%arg0: i32) -> (i32, i32, i32) {
    %c0_i32 = arith.constant 0 : i32
    %c0_i32_0 = arith.constant 0 : i32
    %c0_i32_1 = arith.constant 0 : i32
    return %arg0, %c0_i32, %c0_i32_0 : i32, i32, i32
  }
  func.func @transform_1(%arg0: i32) -> (i32, i32) {
    %c0_i32 = arith.constant 0 : i32
    %c0_i32_0 = arith.constant 0 : i32
    %c0_i32_1 = arith.constant 0 : i32
    return %c0_i32, %c0_i32_0 : i32, i32
  }
  func.func @transform_2(%arg0: i32) -> (i32, i32, i32) {
    %c0_i32 = arith.constant 0 : i32
    %c0_i32_0 = arith.constant 0 : i32
    %c0_i32_1 = arith.constant 0 : i32
    return %arg0, %c0_i32, %c0_i32_0 : i32, i32, i32
  }
}

module attributes {stable_mosaic.version = 11 : i64} {
  func.func @_fused_tail_kernel(%arg0: i32, %arg1: memref<2x16x128xf32, #tpu.memory_space<vmem>>, %arg2: memref<384x128xbf16, #tpu.memory_space<vmem>>, %arg3: memref<128x128xf32, #tpu.memory_space<vmem>>, %arg4: memref<2x128xf32, #tpu.memory_space<vmem>>, %arg5: memref<128x128xf32, #tpu.memory_space<vmem>>, %arg6: memref<2x128xf32, #tpu.memory_space<vmem>>, %arg7: memref<2x16x128xf32, #tpu.memory_space<vmem>>, %arg8: memref<2x32x128xbf16, #tpu.memory_space<vmem>>) attributes {dimension_semantics = [#tpu.dimension_semantics<arbitrary>], iteration_bounds = array<i64: 1>, scalar_prefetch = 0 : i64, scratch_operands = 1 : i64, tpu.core_type = #tpu.core_type<tc>, window_params = [{pipeline_mode = #tpu.pipeline_mode<synchronous>, transform_indices = @transform_0, window_bounds = array<i64: 2, 16, 128>}, {pipeline_mode = #tpu.pipeline_mode<synchronous>, transform_indices = @transform_1, window_bounds = array<i64: 384, 128>}, {pipeline_mode = #tpu.pipeline_mode<synchronous>, transform_indices = @transform_2, window_bounds = array<i64: 128, 128>}, {pipeline_mode = #tpu.pipeline_mode<synchronous>, transform_indices = @transform_3, window_bounds = array<i64: 2, 128>}, {pipeline_mode = #tpu.pipeline_mode<synchronous>, transform_indices = @transform_4, window_bounds = array<i64: 128, 128>}, {pipeline_mode = #tpu.pipeline_mode<synchronous>, transform_indices = @transform_5, window_bounds = array<i64: 2, 128>}, {pipeline_mode = #tpu.pipeline_mode<synchronous>, transform_indices = @transform_6, window_bounds = array<i64: 2, 16, 128>}]} {
    %c0 = arith.constant 0 : index
    %c0_0 = arith.constant 0 : index
    %c0_1 = arith.constant 0 : index
    %0 = vector.load %arg1[%c0, %c0_0, %c0_1] : memref<2x16x128xf32, #tpu.memory_space<vmem>>, vector<2x16x128xf32>
    %1 = vector.shape_cast %0 : vector<2x16x128xf32> to vector<32x128xf32>
    %c0_2 = arith.constant 0 : index
    %c0_3 = arith.constant 0 : index
    %2 = vector.load %arg4[%c0_2, %c0_3] : memref<2x128xf32, #tpu.memory_space<vmem>>, vector<2x128xf32>
    %c0_4 = arith.constant 0 : index
    %c0_5 = arith.constant 0 : index
    %3 = vector.load %arg3[%c0_4, %c0_5] : memref<128x128xf32, #tpu.memory_space<vmem>>, vector<128x128xf32>
    %4 = vector.extract_strided_slice %2 {offsets = [0, 0], sizes = [1, 128], strides = [1, 1]} : vector<2x128xf32> to vector<1x128xf32>
    %5 = vector.extract_strided_slice %2 {offsets = [1, 0], sizes = [1, 128], strides = [1, 1]} : vector<2x128xf32> to vector<1x128xf32>
    %cst = arith.constant dense<0.000000e+00> : vector<32x128xf32>
    %6 = tpu.matmul %1, %3, %cst {dimension_numbers = #tpu.dot_dimension_numbers<[1], [0], [0], [1], [0, 0, 1, 1], [], []>} : vector<32x128xf32>, vector<128x128xf32>, vector<32x128xf32> -> vector<32x128xf32>
    %cst_6 = arith.constant dense<0.000000e+00> : vector<128xf32>
    %7 = vector.multi_reduction <add>, %6, %cst_6 [0] : vector<32x128xf32> to vector<128xf32>
    %8 = vector.shape_cast %7 : vector<128xf32> to vector<1x128xf32>
    %9 = arith.mulf %1, %1 : vector<32x128xf32>
    %cst_7 = arith.constant dense<0.000000e+00> : vector<32x128xf32>
    %10 = tpu.matmul %9, %3, %cst_7 {dimension_numbers = #tpu.dot_dimension_numbers<[1], [0], [0], [1], [0, 0, 1, 1], [], []>} : vector<32x128xf32>, vector<128x128xf32>, vector<32x128xf32> -> vector<32x128xf32>
    %cst_8 = arith.constant dense<0.000000e+00> : vector<128xf32>
    %11 = vector.multi_reduction <add>, %10, %cst_8 [0] : vector<32x128xf32> to vector<128xf32>
    %12 = vector.shape_cast %11 : vector<128xf32> to vector<1x128xf32>
    %cst_9 = arith.constant 5.120000e+02 : f32
    %13 = vector.broadcast %cst_9 : f32 to vector<1x128xf32>
    %14 = arith.divf %8, %13 : vector<1x128xf32>
    %cst_10 = arith.constant 5.120000e+02 : f32
    %15 = vector.broadcast %cst_10 : f32 to vector<1x128xf32>
    %16 = arith.divf %12, %15 : vector<1x128xf32>
    %17 = arith.mulf %14, %14 : vector<1x128xf32>
    %18 = arith.subf %16, %17 : vector<1x128xf32>
    %cst_11 = arith.constant 0.000000e+00 : f32
    %19 = vector.broadcast %cst_11 : f32 to vector<1x128xf32>
    %20 = arith.maximumf %18, %19 : vector<1x128xf32>
    %cst_12 = arith.constant 9.99999974E-6 : f32
    %21 = vector.broadcast %cst_12 : f32 to vector<1x128xf32>
    %22 = arith.addf %20, %21 : vector<1x128xf32>
    %23 = math.rsqrt %22 : vector<1x128xf32>
    %24 = arith.mulf %4, %23 : vector<1x128xf32>
    %25 = arith.mulf %14, %24 : vector<1x128xf32>
    %26 = arith.subf %5, %25 : vector<1x128xf32>
    %27 = vector.broadcast %24 : vector<1x128xf32> to vector<32x128xf32>
    %28 = arith.mulf %1, %27 : vector<32x128xf32>
    %29 = vector.broadcast %26 : vector<1x128xf32> to vector<32x128xf32>
    %30 = arith.addf %28, %29 : vector<32x128xf32>
    %cst_13 = arith.constant 0.000000e+00 : f32
    %31 = vector.broadcast %cst_13 : f32 to vector<32x128xf32>
    %32 = arith.maximumf %30, %31 : vector<32x128xf32>
    %cst_14 = arith.constant 0.000000e+00 : bf16
    %33 = vector.broadcast %cst_14 : bf16 to vector<2x32x128xbf16>
    %c0_15 = arith.constant 0 : index
    %c0_16 = arith.constant 0 : index
    %c0_17 = arith.constant 0 : index
    %34 = vector.load %arg8[%c0_15, %c0_16, %c0_17] : memref<2x32x128xbf16, #tpu.memory_space<vmem>>, vector<2x32x128xbf16>
    tpu.vector_store %arg8[%c0_15, %c0_16, %c0_17], %33 {strides = array<i32>} : memref<2x32x128xbf16, #tpu.memory_space<vmem>>, vector<2x32x128xbf16>,
    %35 = vector.shape_cast %32 : vector<32x128xf32> to vector<2x16x128xf32>
    %36 = arith.truncf %35 : vector<2x16x128xf32> to vector<2x16x128xbf16>
    %c0_18 = arith.constant 0 : index
    %c1 = arith.constant 1 : index
    %c0_19 = arith.constant 0 : index
    %37 = vector.load %arg8[%c0_18, %c1, %c0_19] : memref<2x32x128xbf16, #tpu.memory_space<vmem>>, vector<2x16x128xbf16>
    tpu.vector_store %arg8[%c0_18, %c1, %c0_19], %36 {strides = array<i32>} : memref<2x32x128xbf16, #tpu.memory_space<vmem>>, vector<2x16x128xbf16>,
    %c0_20 = arith.constant 0 : index
    %c0_21 = arith.constant 0 : index
    %c0_22 = arith.constant 0 : index
    %38 = vector.load %arg8[%c0_20, %c0_21, %c0_22] : memref<2x32x128xbf16, #tpu.memory_space<vmem>>, vector<2x16x128xbf16>
    %39 = vector.shape_cast %38 : vector<2x16x128xbf16> to vector<32x128xbf16>
    %c0_23 = arith.constant 0 : index
    %c1_24 = arith.constant 1 : index
    %c0_25 = arith.constant 0 : index
    %40 = vector.load %arg8[%c0_23, %c1_24, %c0_25] : memref<2x32x128xbf16, #tpu.memory_space<vmem>>, vector<2x16x128xbf16>
    %41 = vector.shape_cast %40 : vector<2x16x128xbf16> to vector<32x128xbf16>
    %c0_26 = arith.constant 0 : index
    %c2 = arith.constant 2 : index
    %c0_27 = arith.constant 0 : index
    %42 = vector.load %arg8[%c0_26, %c2, %c0_27] : memref<2x32x128xbf16, #tpu.memory_space<vmem>>, vector<2x16x128xbf16>
    %43 = vector.shape_cast %42 : vector<2x16x128xbf16> to vector<32x128xbf16>
    %44 = tpu.concatenate %39, %41, %43 in 1 : vector<32x128xbf16>, vector<32x128xbf16>, vector<32x128xbf16> -> vector<32x384xbf16>
    %c0_28 = arith.constant 0 : index
    %c0_29 = arith.constant 0 : index
    %45 = vector.load %arg2[%c0_28, %c0_29] : memref<384x128xbf16, #tpu.memory_space<vmem>>, vector<384x128xbf16>
    %cst_30 = arith.constant dense<0.000000e+00> : vector<32x128xf32>
    %46 = tpu.matmul %44, %45, %cst_30 {dimension_numbers = #tpu.dot_dimension_numbers<[1], [0], [0], [1], [0, 0, 1, 1], [], []>} : vector<32x384xbf16>, vector<384x128xbf16>, vector<32x128xf32> -> vector<32x128xf32>
    %c0_31 = arith.constant 0 : index
    %c0_32 = arith.constant 0 : index
    %47 = vector.load %arg6[%c0_31, %c0_32] : memref<2x128xf32, #tpu.memory_space<vmem>>, vector<2x128xf32>
    %c0_33 = arith.constant 0 : index
    %c0_34 = arith.constant 0 : index
    %48 = vector.load %arg5[%c0_33, %c0_34] : memref<128x128xf32, #tpu.memory_space<vmem>>, vector<128x128xf32>
    %49 = vector.extract_strided_slice %47 {offsets = [0, 0], sizes = [1, 128], strides = [1, 1]} : vector<2x128xf32> to vector<1x128xf32>
    %50 = vector.extract_strided_slice %47 {offsets = [1, 0], sizes = [1, 128], strides = [1, 1]} : vector<2x128xf32> to vector<1x128xf32>
    %cst_35 = arith.constant dense<0.000000e+00> : vector<32x128xf32>
    %51 = tpu.matmul %46, %48, %cst_35 {dimension_numbers = #tpu.dot_dimension_numbers<[1], [0], [0], [1], [0, 0, 1, 1], [], []>} : vector<32x128xf32>, vector<128x128xf32>, vector<32x128xf32> -> vector<32x128xf32>
    %cst_36 = arith.constant dense<0.000000e+00> : vector<128xf32>
    %52 = vector.multi_reduction <add>, %51, %cst_36 [0] : vector<32x128xf32> to vector<128xf32>
    %53 = vector.shape_cast %52 : vector<128xf32> to vector<1x128xf32>
    %54 = arith.mulf %46, %46 : vector<32x128xf32>
    %cst_37 = arith.constant dense<0.000000e+00> : vector<32x128xf32>
    %55 = tpu.matmul %54, %48, %cst_37 {dimension_numbers = #tpu.dot_dimension_numbers<[1], [0], [0], [1], [0, 0, 1, 1], [], []>} : vector<32x128xf32>, vector<128x128xf32>, vector<32x128xf32> -> vector<32x128xf32>
    %cst_38 = arith.constant dense<0.000000e+00> : vector<128xf32>
    %56 = vector.multi_reduction <add>, %55, %cst_38 [0] : vector<32x128xf32> to vector<128xf32>
    %57 = vector.shape_cast %56 : vector<128xf32> to vector<1x128xf32>
    %cst_39 = arith.constant 5.120000e+02 : f32
    %58 = vector.broadcast %cst_39 : f32 to vector<1x128xf32>
    %59 = arith.divf %53, %58 : vector<1x128xf32>
    %cst_40 = arith.constant 5.120000e+02 : f32
    %60 = vector.broadcast %cst_40 : f32 to vector<1x128xf32>
    %61 = arith.divf %57, %60 : vector<1x128xf32>
    %62 = arith.mulf %59, %59 : vector<1x128xf32>
    %63 = arith.subf %61, %62 : vector<1x128xf32>
    %cst_41 = arith.constant 0.000000e+00 : f32
    %64 = vector.broadcast %cst_41 : f32 to vector<1x128xf32>
    %65 = arith.maximumf %63, %64 : vector<1x128xf32>
    %cst_42 = arith.constant 9.99999974E-6 : f32
    %66 = vector.broadcast %cst_42 : f32 to vector<1x128xf32>
    %67 = arith.addf %65, %66 : vector<1x128xf32>
    %68 = math.rsqrt %67 : vector<1x128xf32>
    %69 = arith.mulf %49, %68 : vector<1x128xf32>
    %70 = arith.mulf %59, %69 : vector<1x128xf32>
    %71 = arith.subf %50, %70 : vector<1x128xf32>
    %72 = vector.broadcast %69 : vector<1x128xf32> to vector<32x128xf32>
    %73 = arith.mulf %46, %72 : vector<32x128xf32>
    %74 = vector.broadcast %71 : vector<1x128xf32> to vector<32x128xf32>
    %75 = arith.addf %73, %74 : vector<32x128xf32>
    %cst_43 = arith.constant 0.000000e+00 : f32
    %76 = vector.broadcast %cst_43 : f32 to vector<32x128xf32>
    %77 = arith.maximumf %75, %76 : vector<32x128xf32>
    %78 = vector.shape_cast %77 : vector<32x128xf32> to vector<2x16x128xf32>
    %c0_44 = arith.constant 0 : index
    %c0_45 = arith.constant 0 : index
    %c0_46 = arith.constant 0 : index
    %79 = vector.load %arg7[%c0_44, %c0_45, %c0_46] : memref<2x16x128xf32, #tpu.memory_space<vmem>>, vector<2x16x128xf32>
    tpu.vector_store %arg7[%c0_44, %c0_45, %c0_46], %78 {strides = array<i32>} : memref<2x16x128xf32, #tpu.memory_space<vmem>>, vector<2x16x128xf32>,
    return
  }
  func.func @transform_0(%arg0: i32) -> (i32, i32, i32) {
    %c0_i32 = arith.constant 0 : i32
    %c0_i32_0 = arith.constant 0 : i32
    %c0_i32_1 = arith.constant 0 : i32
    %c0_i32_2 = arith.constant 0 : i32
    return %c0_i32, %c0_i32_0, %c0_i32_1 : i32, i32, i32
  }
  func.func @transform_1(%arg0: i32) -> (i32, i32) {
    %c0_i32 = arith.constant 0 : i32
    %c0_i32_0 = arith.constant 0 : i32
    %c0_i32_1 = arith.constant 0 : i32
    return %c0_i32, %c0_i32_0 : i32, i32
  }
  func.func @transform_2(%arg0: i32) -> (i32, i32) {
    %c0_i32 = arith.constant 0 : i32
    %c0_i32_0 = arith.constant 0 : i32
    %c0_i32_1 = arith.constant 0 : i32
    return %c0_i32, %c0_i32_0 : i32, i32
  }
  func.func @transform_3(%arg0: i32) -> (i32, i32) {
    %c0_i32 = arith.constant 0 : i32
    %c0_i32_0 = arith.constant 0 : i32
    %c0_i32_1 = arith.constant 0 : i32
    return %c0_i32, %c0_i32_0 : i32, i32
  }
  func.func @transform_4(%arg0: i32) -> (i32, i32) {
    %c0_i32 = arith.constant 0 : i32
    %c0_i32_0 = arith.constant 0 : i32
    %c0_i32_1 = arith.constant 0 : i32
    return %c0_i32, %c0_i32_0 : i32, i32
  }
  func.func @transform_5(%arg0: i32) -> (i32, i32) {
    %c0_i32 = arith.constant 0 : i32
    %c0_i32_0 = arith.constant 0 : i32
    %c0_i32_1 = arith.constant 0 : i32
    return %c0_i32, %c0_i32_0 : i32, i32
  }
  func.func @transform_6(%arg0: i32) -> (i32, i32, i32) {
    %c0_i32 = arith.constant 0 : i32
    %c0_i32_0 = arith.constant 0 : i32
    %c0_i32_1 = arith.constant 0 : i32
    %c0_i32_2 = arith.constant 0 : i32
    return %c0_i32, %c0_i32_0, %c0_i32_1 : i32, i32, i32
  }
}

</mosaic_0001>

<llo_original>
// kernel: conv_past_future_forward.2
$region0: #{conv_past_future_forward.2}
  #allocation0 [shape = 'u32[]', space=smem, size = 0x4, offset = 0x4, fixed_abs, tag = 'smem constant byte address 0x4 - core index']
  #allocation1 [shape = 'u32[144,128]{1,0:T(1,128)}', space=vmem, size = 0x12000, scoped, tag = 'internal scratch']
  %s0 = inlined_call_operand.vmem [shape: bf16[2,32,128], index: 0, kind: input, shape index: {}]
  %s1 = inlined_call_operand.vmem [shape: bf16[384,128], index: 1, kind: input, shape index: {}]
  %s2 = inlined_call_operand.vmem [shape: f32[2,16,128], index: 2, kind: output, shape index: {}]
  %s3 = sld [smem:[#allocation0]]
  $region41: #{conv_past_future_forward.2} parent=0
    _
  %s5 = ssub.s32 1, %s3
  %s6 = scalar_select 0, %s5, %s3
  loop: start=0, step=1, limit=4
  $region2: #{conv_past_future_forward.2} parent=0 // loop_pre_header
    _
  $region3: #{conv_past_future_forward.2} parent=0 // loop_header
    %s8 = sphi 0, %s12
    %p9 = scmp.ge.s32.totalorder %s8, 4
    %s18 = sphi 0, %s20
    %s21 = sphi 0, %s18
    %s22 = sphi 0, %s21
    %s38 = sphi 0, %s22
    %s42 = sphi 0, %s42
    %s44 = sphi 0, %s42
    %s45 = sphi 0, %s44
    %s59 = sphi 0, %s45
    %s65 = sphi 0, %s67
    %s68 = sphi 0, %s65
    %s69 = sphi 0, %s68
    %s85 = sphi 0, %s69
  $region4: #{conv_past_future_forward.2} parent=0 // loop_header_branch
    %11 = sbr.rel (%p9) target = $region8
  $region5: #{conv_past_future_forward.2} parent=0 // loop_body
    %s13 = ssub.s32 %s8, 1
    %s14 = ssub.s32 %s8, 2
    %s15 = sadd.s32 %s8, 1
    %s16 = ssub.s32 %s8, %s15
    %p17 = scmp.eq.s32.totalorder %s16, 0
    %s19 = sadd.s32 %s18, 1
    %s20 = scalar_select %p17, %s18, %s19
    %p23 = pneg %p17
    %p24 = scmp.eq.s32.totalorder %s8, 1
    %p25 = por %p23, %p24
    %p26 = scmp.ne.s32.totalorder %s18, %s21
    %p27 = scmp.eq.s32.totalorder %s8, 0
    %p28 = por %p26, %p27
    %p29 = scmp.ne.s32.totalorder %s18, %s21
    %p30 = scmp.eq.s32.totalorder %s13, 1
    %p31 = por %p29, %p30
    %p32 = scmp.ne.s32.totalorder %s21, %s22
    %p33 = scmp.eq.s32.totalorder %s13, 0
    %p34 = por %p32, %p33
    %p35 = scmp.ne.s32.totalorder %s21, %s22
    %p36 = scmp.eq.s32.totalorder %s14, 1
    %p37 = por %p35, %p36
    %p39 = scmp.ne.s32.totalorder %s22, %s38
    %p40 = scmp.eq.s32.totalorder %s14, 0
    %p41 = por %p39, %p40
    %s43 = sadd.s32 %s42, 1
    %p46 = scmp.eq.s32.totalorder %s8, 1
    %p47 = scmp.ne.s32.totalorder %s42, %s44
    %p48 = scmp.eq.s32.totalorder %s8, 0
    %p49 = por %p47, %p48
    %p50 = scmp.ne.s32.totalorder %s42, %s44
    %p51 = scmp.eq.s32.totalorder %s13, 1
    %p52 = por %p50, %p51
    %p53 = scmp.ne.s32.totalorder %s44, %s45
    %p54 = scmp.eq.s32.totalorder %s13, 0
    %p55 = por %p53, %p54
    %p56 = scmp.ne.s32.totalorder %s44, %s45
    %p57 = scmp.eq.s32.totalorder %s14, 1
    %p58 = por %p56, %p57
    %p60 = scmp.ne.s32.totalorder %s45, %s59
    %p61 = scmp.eq.s32.totalorder %s14, 0
    %p62 = por %p60, %p61
    %s63 = ssub.s32 %s8, %s15
    %p64 = scmp.eq.s32.totalorder %s63, 0
    %s66 = sadd.s32 %s65, 1
    %s67 = scalar_select %p64, %s65, %s66
    %p70 = pneg %p64
    %p71 = scmp.eq.s32.totalorder %s8, 1
    %p72 = por %p70, %p71
    %p73 = scmp.ne.s32.totalorder %s65, %s68
    %p74 = scmp.eq.s32.totalorder %s8, 0
    %p75 = por %p73, %p74
    %p76 = scmp.ne.s32.totalorder %s65, %s68
    %p77 = scmp.eq.s32.totalorder %s13, 1
    %p78 = por %p76, %p77
    %p79 = scmp.ne.s32.totalorder %s68, %s69
    %p80 = scmp.eq.s32.totalorder %s13, 0
    %p81 = por %p79, %p80
    %p82 = scmp.ne.s32.totalorder %s68, %s69
    %p83 = scmp.eq.s32.totalorder %s14, 1
    %p84 = por %p82, %p83
    %p86 = scmp.ne.s32.totalorder %s69, %s85
    %p87 = scmp.eq.s32.totalorder %s14, 0
    %p88 = por %p86, %p87
    %p89 = scmp.le.s32.totalorder 1, %s8
    %p90 = scmp.lt.s32.totalorder %s8, 3
    %p91 = pnand %p89, %p90
    %p92 = pneg %p91
    // Predicated region
    $region9: #{conv_past_future_forward.2} parent=5 // pred_check
      _
    $region10: #{conv_past_future_forward.2} parent=5 // pred_check_branch
      %94 = sbr.rel (%p91) target = $region12
    $region11: #{conv_past_future_forward.2} parent=5 // pred_region
      %s95 = ssub.s32 %s8, 1
      // Predicated region
      $region13: #{conv_past_future_forward.2} parent=11 // pred_check
        %p96 = pneg %p55
      $region14: #{conv_past_future_forward.2} parent=11 // pred_check_branch
        %98 = sbr.rel (%p96) target = $region16
      $region15: #{conv_past_future_forward.2} parent=11 // pred_region
        _
      $region16: #{conv_past_future_forward.2} parent=11 // pred_fallthru
        _
    $region12: #{conv_past_future_forward.2} parent=5 // pred_fallthru
      _
    %p99 = scmp.lt.s32.totalorder %s8, 2
    // Predicated region
    $region17: #{conv_past_future_forward.2} parent=5 // pred_check
      %p100 = pneg %p99
    $region18: #{conv_past_future_forward.2} parent=5 // pred_check_branch
      %102 = sbr.rel (%p100) target = $region20
    $region19: #{conv_past_future_forward.2} parent=5 // pred_region
      // Predicated region
      $region21: #{conv_past_future_forward.2} parent=19 // pred_check
        %p103 = pneg %p28
      $region22: #{conv_past_future_forward.2} parent=19 // pred_check_branch
        %105 = sbr.rel (%p103) target = $region24
      $region23: #{conv_past_future_forward.2} parent=19 // pred_region
        %p106 = scmp.lt.s32.totalorder %s8, 1
        %s107 = scalar_select %p106, %s8, 1
        %s108 = smul.addr %s107, 4
        %s109 = smul.addr %s108, 4
        %s110 = scalar_lea.vmem %s0, %s109
      $region24: #{conv_past_future_forward.2} parent=19 // pred_fallthru
        _
    $region20: #{conv_past_future_forward.2} parent=5 // pred_fallthru
      _
    %p111 = scmp.le.s32.totalorder 1, %s8
    %p112 = scmp.lt.s32.totalorder %s8, 3
    %p113 = pnand %p111, %p112
    %p114 = pneg %p113
    // Predicated region
    $region25: #{conv_past_future_forward.2} parent=5 // pred_check
      _
    $region26: #{conv_past_future_forward.2} parent=5 // pred_check_branch
      %116 = sbr.rel (%p113) target = $region28
    $region27: #{conv_past_future_forward.2} parent=5 // pred_region
      %s117 = ssub.s32 %s8, 1
      %p118 = scmp.lt.s32.totalorder %s13, 1
      %s119 = scalar_select %p118, %s13, 1
      %s120 = smul.addr %s119, 4
      %s121 = smul.addr %s120, 4
      %s122 = scalar_lea.vmem %s0, %s121
      %p123 = pneg %p34
      %p124 = pneg %p31
      %p125 = pneg %p55
      %p126 = pneg %p52
      %p127 = pneg %p81
      %p128 = pneg %p78
      %p129 = scmp.lt.s32.totalorder %s13, 1
      %s130 = scalar_select %p129, %s13, 1
      %s131 = smul.addr %s130, 2
      %s132 = smul.addr %s131, 8
      %s133 = scalar_lea.vmem %s2, %s132
      %p134 = scmp.lt.s32.totalorder %s13, 1
      %s135 = scalar_select %p134, %s13, 1
      %s136 = smul.addr %s135, 4
      %s137 = smul.addr %s136, 4
      %s138 = scalar_lea.vmem %s0, %s137
      %p139 = scmp.lt.s32.totalorder %s13, 1
      %s140 = scalar_select %p139, %s13, 1
      %s141 = smul.addr %s140, 2
      %s142 = smul.addr %s141, 8
      %s143 = scalar_lea.vmem %s2, %s142
      %v145 = vld [vmem:[%s138] sm:$0xf]
      %v146 = vld [vmem:[%s138 + $0x4] sm:$0xf]
      %v147 = vld [vmem:[%s138 + $0x8] sm:$0x1]
      %v148 = vld [vmem:[%s138] sm:$0xe]
      %v151 = vunpack.c.l.b16 %v145
      %v152 = vunpack.c.l.b16 %v146
      %v153 = vpack.c.b16 %v152, %v151
      %v156 = vunpack.c.l.b16 %v147
      %v157 = vpack.c.b16 %v156, %v156
      %vm158 = vsmask.f32 7424
      %v160 = vshrl.u32 %v153, 16
      %v162 = vshll.u32 %v153, 16
      %v164 = vrot.slane %v162, 1
      %v165 = vor.u32 %v160, %v164
      %v167 = vshll.u32 %v157, 16
      %v169 = vrot.slane %v167, 1
      %v170 = vsel %vm158, %v165, %v169
      %v173 = vunpack.c.l.b16 %v148
      %v174 = vpack.c.b16 %v152, %v173
      %vm175 = vcmask 1046528
      %v176 = vrot.slane %v174, 1
      %v177 = vrot.slane %v157, 1
      %v178 = vsel %vm175, %v176, %v177
      %v180 = vld [vmem:[%s1] sm:$0xf]
      %v181 = vld [vmem:[%s1 + $0x4] sm:$0xf]
      %v182 = vld [vmem:[%s1 + $0x8] sm:$0xf]
      %v183 = vld [vmem:[%s1 + $0xc] sm:$0xf]
      %v184 = vld [vmem:[%s1 + $0x10] sm:$0xf]
      %v185 = vld [vmem:[%s1 + $0x14] sm:$0xf]
      %v186 = vld [vmem:[%s1 + $0x18] sm:$0xf]
      %v187 = vld [vmem:[%s1 + $0x1c] sm:$0xf]
      %v188 = vld [vmem:[%s1 + $0x20] sm:$0xf]
      %v189 = vld [vmem:[%s1 + $0x24] sm:$0xf]
      %v190 = vld [vmem:[%s1 + $0x28] sm:$0xf]
      %v191 = vld [vmem:[%s1 + $0x2c] sm:$0xf]
      %v192 = vld [vmem:[%s1 + $0x30] sm:$0xf]
      %v193 = vld [vmem:[%s1 + $0x34] sm:$0xf]
      %v194 = vld [vmem:[%s1 + $0x38] sm:$0xf]
      %v195 = vld [vmem:[%s1 + $0x3c] sm:$0xf]
      %v196 = vld [vmem:[%s1 + $0x40] sm:$0xf]
      %v197 = vld [vmem:[%s1 + $0x44] sm:$0xf]
      %v198 = vld [vmem:[%s1 + $0x48] sm:$0xf]
      %v199 = vld [vmem:[%s1 + $0x4c] sm:$0xf]
      %v200 = vld [vmem:[%s1 + $0x50] sm:$0xf]
      %v201 = vld [vmem:[%s1 + $0x54] sm:$0xf]
      %v202 = vld [vmem:[%s1 + $0x58] sm:$0xf]
      %v203 = vld [vmem:[%s1 + $0x5c] sm:$0xf]
      %v204 = vld [vmem:[%s1 + $0x60] sm:$0xf]
      %v205 = vld [vmem:[%s1 + $0x64] sm:$0xf]
      %v206 = vld [vmem:[%s1 + $0x68] sm:$0xf]
      %v207 = vld [vmem:[%s1 + $0x6c] sm:$0xf]
      %v208 = vld [vmem:[%s1 + $0x70] sm:$0xf]
      %v209 = vld [vmem:[%s1 + $0x74] sm:$0xf]
      %v210 = vld [vmem:[%s1 + $0x78] sm:$0xf]
      %v211 = vld [vmem:[%s1 + $0x7c] sm:$0xf]
      %v212 = vld [vmem:[%s1 + $0x80] sm:$0xf]
      %v213 = vld [vmem:[%s1 + $0x84] sm:$0xf]
      %v214 = vld [vmem:[%s1 + $0x88] sm:$0xf]
      %v215 = vld [vmem:[%s1 + $0x8c] sm:$0xf]
      %v216 = vld [vmem:[%s1 + $0x90] sm:$0xf]
      %v217 = vld [vmem:[%s1 + $0x94] sm:$0xf]
      %v218 = vld [vmem:[%s1 + $0x98] sm:$0xf]
      %v219 = vld [vmem:[%s1 + $0x9c] sm:$0xf]
      %v220 = vld [vmem:[%s1 + $0xa0] sm:$0xf]
      %v221 = vld [vmem:[%s1 + $0xa4] sm:$0xf]
      %v222 = vld [vmem:[%s1 + $0xa8] sm:$0xf]
      %v223 = vld [vmem:[%s1 + $0xac] sm:$0xf]
      %v224 = vld [vmem:[%s1 + $0xb0] sm:$0xf]
      %v225 = vld [vmem:[%s1 + $0xb4] sm:$0xf]
      %v226 = vld [vmem:[%s1 + $0xb8] sm:$0xf]
      %v227 = vld [vmem:[%s1 + $0xbc] sm:$0xf]
      %v276 = vunpack.c.l.b16 %v180
      %v277 = vunpack.c.l.b16 %v181
      %v278 = vunpack.c.l.b16 %v182
      %v279 = vunpack.c.l.b16 %v183
      %v280 = vunpack.c.l.b16 %v184
      %v281 = vunpack.c.l.b16 %v185
      %v282 = vunpack.c.l.b16 %v186
      %v283 = vunpack.c.l.b16 %v187
      %v284 = vunpack.c.l.b16 %v188
      %v285 = vunpack.c.l.b16 %v189
      %v286 = vunpack.c.l.b16 %v190
      %v287 = vunpack.c.l.b16 %v191
      %v288 = vunpack.c.l.b16 %v192
      %v289 = vunpack.c.l.b16 %v193
      %v290 = vunpack.c.l.b16 %v194
      %v291 = vunpack.c.l.b16 %v195
      %v292 = vunpack.c.l.b16 %v196
      %v293 = vunpack.c.l.b16 %v197
      %v294 = vunpack.c.l.b16 %v198
      %v295 = vunpack.c.l.b16 %v199
      %v296 = vunpack.c.l.b16 %v200
      %v297 = vunpack.c.l.b16 %v201
      %v298 = vunpack.c.l.b16 %v202
      %v299 = vunpack.c.l.b16 %v203
      %v300 = vunpack.c.l.b16 %v204
      %v301 = vunpack.c.l.b16 %v205
      %v302 = vunpack.c.l.b16 %v206
      %v303 = vunpack.c.l.b16 %v207
      %v304 = vunpack.c.l.b16 %v208
      %v305 = vunpack.c.l.b16 %v209
      %v306 = vunpack.c.l.b16 %v210
      %v307 = vunpack.c.l.b16 %v211
      %v308 = vunpack.c.l.b16 %v212
      %v309 = vunpack.c.l.b16 %v213
      %v310 = vunpack.c.l.b16 %v214
      %v311 = vunpack.c.l.b16 %v215
      %v312 = vunpack.c.l.b16 %v216
      %v313 = vunpack.c.l.b16 %v217
      %v314 = vunpack.c.l.b16 %v218
      %v315 = vunpack.c.l.b16 %v219
      %v316 = vunpack.c.l.b16 %v220
      %v317 = vunpack.c.l.b16 %v221
      %v318 = vunpack.c.l.b16 %v222
      %v319 = vunpack.c.l.b16 %v223
      %v320 = vunpack.c.l.b16 %v224
      %v321 = vunpack.c.l.b16 %v225
      %v322 = vunpack.c.l.b16 %v226
      %v323 = vunpack.c.l.b16 %v227
      %v324 = vpack.c.b16 %v277, %v276
      %v325 = vpack.c.b16 %v279, %v278
      %v326 = vpack.c.b16 %v281, %v280
      %v327 = vpack.c.b16 %v283, %v282
      %v328 = vpack.c.b16 %v285, %v284
      %v329 = vpack.c.b16 %v287, %v286
      %v330 = vpack.c.b16 %v289, %v288
      %v331 = vpack.c.b16 %v291, %v290
      %v332 = vpack.c.b16 %v293, %v292
      %v333 = vpack.c.b16 %v295, %v294
      %v334 = vpack.c.b16 %v297, %v296
      %v335 = vpack.c.b16 %v299, %v298
      %v336 = vpack.c.b16 %v301, %v300
      %v337 = vpack.c.b16 %v303, %v302
      %v338 = vpack.c.b16 %v305, %v304
      %v339 = vpack.c.b16 %v307, %v306
      %v340 = vpack.c.b16 %v309, %v308
      %v341 = vpack.c.b16 %v311, %v310
      %v342 = vpack.c.b16 %v313, %v312
      %v343 = vpack.c.b16 %v315, %v314
      %v344 = vpack.c.b16 %v317, %v316
      %v345 = vpack.c.b16 %v319, %v318
      %v346 = vpack.c.b16 %v321, %v320
      %v347 = vpack.c.b16 %v323, %v322
      %372 = vmatprep.subr.bf16.mxu0 0
      %373 = vmatpush1.bf16.msra.mxu0 %v324
      %374 = vmatprep.subr.bf16.mxu0 0
      %375 = vmatpush1.bf16.msra.mxu0 %v325
      %376 = vmatprep.subr.bf16.mxu0 0
      %377 = vmatpush1.bf16.msra.mxu0 %v326
      %378 = vmatprep.subr.bf16.mxu0 0
      %379 = vmatpush1.bf16.msra.mxu0 %v327
      %380 = vmatprep.subr.bf16.mxu0 0
      %381 = vmatpush1.bf16.msra.mxu0 %v328
      %382 = vmatprep.subr.bf16.mxu0 0
      %383 = vmatpush1.bf16.msra.mxu0 %v329
      %384 = vmatprep.subr.bf16.mxu0 0
      %385 = vmatpush1.bf16.msra.mxu0 %v330
      %386 = vmatprep.subr.bf16.mxu0 0
      %387 = vmatpush1.bf16.msra.mxu0 %v331
      %388 = vmatprep.subr.bf16.mxu0 0
      %389 = vmatpush1.bf16.msra.mxu0 %v332
      %390 = vmatprep.subr.bf16.mxu0 0
      %391 = vmatpush1.bf16.msra.mxu0 %v333
      %392 = vmatprep.subr.bf16.mxu0 0
      %393 = vmatpush1.bf16.msra.mxu0 %v334
      %394 = vmatprep.subr.bf16.mxu0 0
      %395 = vmatpush1.bf16.msra.mxu0 %v335
      %396 = vmatprep.subr.bf16.mxu0 0
      %397 = vmatpush1.bf16.msra.mxu0 %v336
      %398 = vmatprep.subr.bf16.mxu0 0
      %399 = vmatpush1.bf16.msra.mxu0 %v337
      %400 = vmatprep.subr.bf16.mxu0 0
      %401 = vmatpush1.bf16.msra.mxu0 %v338
      %402 = vmatprep.subr.bf16.mxu0 0
      %403 = vmatpush1.bf16.msra.mxu0 %v339
      %404 = vmatprep.mubr.bf16.mxu0 %v170
      %405 = vmatmul.mubr.bf16.gmra.mrb[0].mxu0 %v153
      %v406 = vpop.f32.mrb[0].mxu0
      %v407 = vadd.f32 0.0, %v406
      %v408 = vpop.f32.mrb[0].mxu0
      %v409 = vpop.f32.mrb[0].mxu0
      %v410 = vadd.f32 0.0, %v409
      %v411 = vpop.f32.mrb[0].mxu0
      %412 = vdwg.mxu0
      %413 = vmatprep.subr.bf16.mxu0 0
      %414 = vmatpush1.bf16.msra.mxu0 %v340
      %415 = vmatprep.subr.bf16.mxu0 0
      %416 = vmatpush1.bf16.msra.mxu0 %v341
      %417 = vmatprep.subr.bf16.mxu0 0
      %418 = vmatpush1.bf16.msra.mxu0 %v342
      %419 = vmatprep.subr.bf16.mxu0 0
      %420 = vmatpush1.bf16.msra.mxu0 %v343
      %421 = vmatprep.subr.bf16.mxu0 0
      %422 = vmatpush1.bf16.msra.mxu0 %v344
      %423 = vmatprep.subr.bf16.mxu0 0
      %424 = vmatpush1.bf16.msra.mxu0 %v345
      %425 = vmatprep.subr.bf16.mxu0 0
      %426 = vmatpush1.bf16.msra.mxu0 %v346
      %427 = vmatprep.subr.bf16.mxu0 0
      %428 = vmatpush1.bf16.msra.mxu0 %v347
      %429 = vmatprep.subr.bf16.mxu0 0
      %430 = vmatpush1.bf16.msra.mxu0 0
      %431 = vmatprep.subr.bf16.mxu0 0
      %432 = vmatpush1.bf16.msra.mxu0 0
      %433 = vmatprep.subr.bf16.mxu0 0
      %434 = vmatpush1.bf16.msra.mxu0 0
      %435 = vmatprep.subr.bf16.mxu0 0
      %436 = vmatpush1.bf16.msra.mxu0 0
      %437 = vmatprep.subr.bf16.mxu0 0
      %438 = vmatpush1.bf16.msra.mxu0 0
      %439 = vmatprep.subr.bf16.mxu0 0
      %440 = vmatpush1.bf16.msra.mxu0 0
      %441 = vmatprep.subr.bf16.mxu0 0
      %442 = vmatpush1.bf16.msra.mxu0 0
      %443 = vmatprep.subr.bf16.mxu0 0
      %444 = vmatpush1.bf16.msra.mxu0 0
      %445 = vmatprep.mubr.bf16.mxu0 0
      %446 = vmatmul.mubr.bf16.gmra.mrb[0].mxu0 %v178
      %v447 = vpop.f32.mrb[0].mxu0
      %v448 = vadd.f32 %v407, %v447
      %v449 = vpop.f32.mrb[0].mxu0
      %v450 = vpop.f32.mrb[0].mxu0
      %v451 = vadd.f32 %v410, %v450
      %v452 = vpop.f32.mrb[0].mxu0
      %453 = vdwg.mxu0
      %454 = vst [vmem:[%s143] sm:$0xff] %v448
      %455 = vst [vmem:[%s143 + $0x8] sm:$0xff] %v451
      %p456 = scmp.lt.s32.totalorder %s13, 1
      %s457 = scalar_select %p456, %s13, 1
      %s458 = smul.addr %s457, 2
      %s459 = smul.addr %s458, 8
      %s460 = scalar_lea.vmem %s2, %s459
      // Predicated region
      $region29: #{conv_past_future_forward.2} parent=27 // pred_check
        %p461 = pneg %p78
      $region30: #{conv_past_future_forward.2} parent=27 // pred_check_branch
        %463 = sbr.rel (%p461) target = $region32
      $region31: #{conv_past_future_forward.2} parent=27 // pred_region
        _
      $region32: #{conv_past_future_forward.2} parent=27 // pred_fallthru
        _
    $region28: #{conv_past_future_forward.2} parent=5 // pred_fallthru
      _
    %p464 = scmp.le.s32.totalorder 2, %s8
    // Predicated region
    $region33: #{conv_past_future_forward.2} parent=5 // pred_check
      %p465 = pneg %p464
    $region34: #{conv_past_future_forward.2} parent=5 // pred_check_branch
      %467 = sbr.rel (%p465) target = $region36
    $region35: #{conv_past_future_forward.2} parent=5 // pred_region
      %s468 = ssub.s32 %s8, 2
      // Predicated region
      $region37: #{conv_past_future_forward.2} parent=35 // pred_check
        %p469 = pneg %p84
      $region38: #{conv_past_future_forward.2} parent=35 // pred_check_branch
        %471 = sbr.rel (%p469) target = $region40
      $region39: #{conv_past_future_forward.2} parent=35 // pred_region
        %p472 = scmp.lt.s32.totalorder %s14, 1
        %s473 = scalar_select %p472, %s14, 1
        %s474 = smul.addr %s473, 2
        %s475 = smul.addr %s474, 8
        %s476 = scalar_lea.vmem %s2, %s475
      $region40: #{conv_past_future_forward.2} parent=35 // pred_fallthru
        _
    $region36: #{conv_past_future_forward.2} parent=5 // pred_fallthru
      _
  $region6: #{conv_past_future_forward.2} parent=0 // loop_footer
    %s12 = sadd.s32 1, %s8
  $region7: #{conv_past_future_forward.2} parent=0 // loop_footer_branch
    %7 = sbr.rel target = $region3
  $region8: #{conv_past_future_forward.2} parent=0 // loop_exit
    _

// kernel: tile.28
$region0: #{tile.28}
  #allocation0 [shape = 's32[1]{0}', space=sflag, size = 0x4, scoped, tag = 'scoped memory for tile.28']
  %s0 = inlined_call_operand.vmem [shape: f32[8], index: 0, kind: input, shape index: {}]
  %s1 = inlined_call_operand.vmem [shape: f32[16,8], index: 1, kind: output, shape index: {}]
  // Predicated region
  $region2: #{tile.28} parent=0 // pred_check
    _
  $region3: #{tile.28} parent=0 // pred_check_branch
    %3 = sbr.rel (0) target = $region5
  $region4: #{tile.28} parent=0 // pred_region
    _
  $region5: #{tile.28} parent=0 // pred_fallthru
    _
  %v4 = vld [vmem:[%s0] ss:$0 sm:$0xff]
  %5 = vst [vmem:[%s1] sm:$0xff] %v4
  %s6 = scalar_lea.vmem %s1, 8
  %7 = vst [vmem:[%s6] sm:$0xff] %v4

// kernel: tile.38
$region0: #{tile.38}
  #allocation0 [shape = 's32[1]{0}', space=sflag, size = 0x4, scoped, tag = 'scoped memory for tile.38']
  %s0 = inlined_call_operand.vmem [shape: f32[4], index: 0, kind: input, shape index: {}]
  %s1 = inlined_call_operand.vmem [shape: f32[16,4], index: 1, kind: output, shape index: {}]
  // Predicated region
  $region2: #{tile.38} parent=0 // pred_check
    _
  $region3: #{tile.38} parent=0 // pred_check_branch
    %3 = sbr.rel (0) target = $region5
  $region4: #{tile.38} parent=0 // pred_region
    _
  $region5: #{tile.38} parent=0 // pred_fallthru
    _
  %v4 = vld [vmem:[%s0] ss:$0 sm:$0xff]
  %5 = vst [vmem:[%s1] sm:$0xff] %v4
  %s6 = scalar_lea.vmem %s1, 8
  %7 = vst [vmem:[%s6] sm:$0xff] %v4

// kernel: tile.39
$region0: #{tile.39}
  %s0 = inlined_call_operand.vmem [shape: f32[16,4], index: 0, kind: input, shape index: {}]
  %s1 = inlined_call_operand.vmem [shape: f32[64], index: 1, kind: output, shape index: {}]
  $region1: #{tile.39} parent=0
    #allocation0 [shape = 'u8[4096]{0}', space=vmem, size = 0x1000, scoped, tag = 'scoped mem for output reshape']
    %v2 = vld [vmem:[%s0] sm:$0x1]
    %vm3 = vcmask 31744
    %4 = vst.msk [vmem:[#allocation0] sm:$0x1] %vm3, %v2
    %s5 = scalar_lea.vmem %s0, 15
    %v6 = vld [vmem:[%s5] sm:$0x1]
    %7 = vrot.lane.b32.xlu0 %v6, 60
    %v8 = vpop.permute.xlu0 %7
    %vm9 = vcmask 523744
    %10 = vst.msk [vmem:[#allocation0] sm:$0x1] %vm9, %v8
    %s11 = scalar_lea.vmem %s0, 14
    %v12 = vld [vmem:[%s11] sm:$0x1]
    %13 = vrot.lane.b32.xlu0 %v12, 56
    %v14 = vpop.permute.xlu0 %13
    %vm15 = vcmask 490944
    %16 = vst.msk [vmem:[#allocation0] sm:$0x1] %vm15, %v14
    %s17 = scalar_lea.vmem %s0, 13
    %v18 = vld [vmem:[%s17] sm:$0x1]
    %19 = vrot.lane.b32.xlu0 %v18, 52
    %v20 = vpop.permute.xlu0 %19
    %vm21 = vcmask 458144
    %22 = vst.msk [vmem:[#allocation0] sm:$0x1] %vm21, %v20
    %s23 = scalar_lea.vmem %s0, 12
    %v24 = vld [vmem:[%s23] sm:$0x1]
    %25 = vrot.lane.b32.xlu0 %v24, 48
    %v26 = vpop.permute.xlu0 %25
    %vm27 = vcmask 425344
    %28 = vst.msk [vmem:[#allocation0] sm:$0x1] %vm27, %v26
    %s29 = scalar_lea.vmem %s0, 11
    %v30 = vld [vmem:[%s29] sm:$0x1]
    %31 = vrot.lane.b32.xlu0 %v30, 44
    %v32 = vpop.permute.xlu0 %31
    %vm33 = vcmask 392544
    %34 = vst.msk [vmem:[#allocation0] sm:$0x1] %vm33, %v32
    %s35 = scalar_lea.vmem %s0, 10
    %v36 = vld [vmem:[%s35] sm:$0x1]
    %37 = vrot.lane.b32.xlu0 %v36, 40
    %v38 = vpop.permute.xlu0 %37
    %vm39 = vcmask 359744
    %40 = vst.msk [vmem:[#allocation0] sm:$0x1] %vm39, %v38
    %s41 = scalar_lea.vmem %s0, 9
    %v42 = vld [vmem:[%s41] sm:$0x1]
    %43 = vrot.lane.b32.xlu0 %v42, 36
    %v44 = vpop.permute.xlu0 %43
    %vm45 = vcmask 326944
    %46 = vst.msk [vmem:[#allocation0] sm:$0x1] %vm45, %v44
    %s47 = scalar_lea.vmem %s0, 8
    %v48 = vld [vmem:[%s47] sm:$0x1]
    %49 = vrot.lane.b32.xlu0 %v48, 32
    %v50 = vpop.permute.xlu0 %49
    %vm51 = vcmask 294144
    %52 = vst.msk [vmem:[#allocation0] sm:$0x1] %vm51, %v50
    %s53 = scalar_lea.vmem %s0, 7
    %v54 = vld [vmem:[%s53] sm:$0x1]
    %55 = vrot.lane.b32.xlu0 %v54, 28
    %v56 = vpop.permute.xlu0 %55
    %vm57 = vcmask 261344
    %58 = vst.msk [vmem:[#allocation0] sm:$0x1] %vm57, %v56
    %s59 = scalar_lea.vmem %s0, 6
    %v60 = vld [vmem:[%s59] sm:$0x1]
    %61 = vrot.lane.b32.xlu0 %v60, 24
    %v62 = vpop.permute.xlu0 %61
    %vm63 = vcmask 228544
    %64 = vst.msk [vmem:[#allocation0] sm:$0x1] %vm63, %v62
    %s65 = scalar_lea.vmem %s0, 5
    %v66 = vld [vmem:[%s65] sm:$0x1]
    %67 = vrot.lane.b32.xlu0 %v66, 20
    %v68 = vpop.permute.xlu0 %67
    %vm69 = vcmask 195744
    %70 = vst.msk [vmem:[#allocation0] sm:$0x1] %vm69, %v68
    %s71 = scalar_lea.vmem %s0, 4
    %v72 = vld [vmem:[%s71] sm:$0x1]
    %73 = vrot.lane.b32.xlu0 %v72, 16
    %v74 = vpop.permute.xlu0 %73
    %vm75 = vcmask 162944
    %76 = vst.msk [vmem:[#allocation0] sm:$0x1] %vm75, %v74
    %s77 = scalar_lea.vmem %s0, 3
    %v78 = vld [vmem:[%s77] sm:$0x1]
    %79 = vrot.lane.b32.xlu0 %v78, 12
    %v80 = vpop.permute.xlu0 %79
    %vm81 = vcmask 130144
    %82 = vst.msk [vmem:[#allocation0] sm:$0x1] %vm81, %v80
    %s83 = scalar_lea.vmem %s0, 2
    %v84 = vld [vmem:[%s83] sm:$0x1]
    %85 = vrot.lane.b32.xlu0 %v84, 8
    %v86 = vpop.permute.xlu0 %85
    %vm87 = vcmask 97344
    %88 = vst.msk [vmem:[#allocation0] sm:$0x1] %vm87, %v86
    %s89 = scalar_lea.vmem %s0, 1
    %v90 = vld [vmem:[%s89] sm:$0x1]
    %91 = vrot.lane.b32.xlu0 %v90, 4
    %v92 = vpop.permute.xlu0 %91
    %vm93 = vcmask 64544
    %94 = vst.msk [vmem:[#allocation0] sm:$0x1] %vm93, %v92
    %s96 = sshllo.u32 0, 1
    %v98 = vld [vmem:[#allocation0] sm:%s96]
    %s99 = sshllo.u32 0, 1
    %100 = vst [vmem:[%s1] sm:%s99] %v98

// kernel: conv_past_future_forward.3
$region0: #{conv_past_future_forward.3}
  #allocation0 [shape = 'u32[]', space=smem, size = 0x4, offset = 0x4, fixed_abs, tag = 'smem constant byte address 0x4 - core index']
  #allocation1 [shape = 'u32[144,128]{1,0:T(1,128)}', space=vmem, size = 0x12000, scoped, tag = 'internal scratch']
  #allocation2 [shape = 'bf16[2,32,128]{2,1,0:T(16,128)(2,1)}', space=vmem, size = 0x4000, scoped, tag = 'scratch operand']
  %s0 = inlined_call_operand.vmem [shape: f32[2,16,128], index: 0, kind: input, shape index: {}]
  %s1 = inlined_call_operand.vmem [shape: bf16[384,128], index: 1, kind: input, shape index: {}]
  %s2 = inlined_call_operand.vmem [shape: f32[128,128], index: 2, kind: input, shape index: {}]
  %s3 = inlined_call_operand.vmem [shape: f32[2,128], index: 3, kind: input, shape index: {}]
  %s4 = inlined_call_operand.vmem [shape: f32[128,128], index: 4, kind: input, shape index: {}]
  %s5 = inlined_call_operand.vmem [shape: f32[2,128], index: 5, kind: input, shape index: {}]
  %s6 = inlined_call_operand.vmem [shape: f32[2,16,128], index: 6, kind: output, shape index: {}]
  %s7 = sld [smem:[#allocation0]]
  $region34: #{conv_past_future_forward.3} parent=0
    _
  %s9 = ssub.s32 1, %s7
  %s10 = scalar_select 0, %s9, %s7
  // Predicated region
  $region2: #{conv_past_future_forward.3} parent=0 // pred_check
    _
  $region3: #{conv_past_future_forward.3} parent=0 // pred_check_branch
    %12 = sbr.rel (0) target = $region5
  $region4: #{conv_past_future_forward.3} parent=0 // pred_region
    _
  $region5: #{conv_past_future_forward.3} parent=0 // pred_fallthru
    _
  // Predicated region
  $region6: #{conv_past_future_forward.3} parent=0 // pred_check
    _
  $region7: #{conv_past_future_forward.3} parent=0 // pred_check_branch
    %14 = sbr.rel (0) target = $region9
  $region8: #{conv_past_future_forward.3} parent=0 // pred_region
    _
  $region9: #{conv_past_future_forward.3} parent=0 // pred_fallthru
    _
  // Predicated region
  $region10: #{conv_past_future_forward.3} parent=0 // pred_check
    _
  $region11: #{conv_past_future_forward.3} parent=0 // pred_check_branch
    %16 = sbr.rel (0) target = $region13
  $region12: #{conv_past_future_forward.3} parent=0 // pred_region
    _
  $region13: #{conv_past_future_forward.3} parent=0 // pred_fallthru
    _
  // Predicated region
  $region14: #{conv_past_future_forward.3} parent=0 // pred_check
    _
  $region15: #{conv_past_future_forward.3} parent=0 // pred_check_branch
    %18 = sbr.rel (0) target = $region17
  $region16: #{conv_past_future_forward.3} parent=0 // pred_region
    _
  $region17: #{conv_past_future_forward.3} parent=0 // pred_fallthru
    _
  // Predicated region
  $region18: #{conv_past_future_forward.3} parent=0 // pred_check
    _
  $region19: #{conv_past_future_forward.3} parent=0 // pred_check_branch
    %20 = sbr.rel (0) target = $region21
  $region20: #{conv_past_future_forward.3} parent=0 // pred_region
    _
  $region21: #{conv_past_future_forward.3} parent=0 // pred_fallthru
    _
  // Predicated region
  $region22: #{conv_past_future_forward.3} parent=0 // pred_check
    _
  $region23: #{conv_past_future_forward.3} parent=0 // pred_check_branch
    %22 = sbr.rel (0) target = $region25
  $region24: #{conv_past_future_forward.3} parent=0 // pred_region
    _
  $region25: #{conv_past_future_forward.3} parent=0 // pred_fallthru
    _
  %v24 = vld [vmem:[%s0] sm:$0xff]
  %v25 = vld [vmem:[%s0 + $0x8] sm:$0xff]
  %v26 = vld [vmem:[%s0 + $0x10] sm:$0xff]
  %v27 = vld [vmem:[%s0 + $0x18] sm:$0xff]
  %v28 = vld [vmem:[%s3] sm:$0x3]
  %v29 = vld [vmem:[%s2] sm:$0xff]
  %v30 = vld [vmem:[%s2 + $0x8] sm:$0xff]
  %v31 = vld [vmem:[%s2 + $0x10] sm:$0xff]
  %v32 = vld [vmem:[%s2 + $0x18] sm:$0xff]
  %v33 = vld [vmem:[%s2 + $0x20] sm:$0xff]
  %v34 = vld [vmem:[%s2 + $0x28] sm:$0xff]
  %v35 = vld [vmem:[%s2 + $0x30] sm:$0xff]
  %v36 = vld [vmem:[%s2 + $0x38] sm:$0xff]
  %v37 = vld [vmem:[%s2 + $0x40] sm:$0xff]
  %v38 = vld [vmem:[%s2 + $0x48] sm:$0xff]
  %v39 = vld [vmem:[%s2 + $0x50] sm:$0xff]
  %v40 = vld [vmem:[%s2 + $0x58] sm:$0xff]
  %v41 = vld [vmem:[%s2 + $0x60] sm:$0xff]
  %v42 = vld [vmem:[%s2 + $0x68] sm:$0xff]
  %v43 = vld [vmem:[%s2 + $0x70] sm:$0xff]
  %v44 = vld [vmem:[%s2 + $0x78] sm:$0xff]
  %45 = vmatprep.subr.mxu0 0.0
  %46 = vmatpush1.msra.mxu0 %v29
  %47 = vmatprep.subr.mxu0 0.0
  %48 = vmatpush1.msra.mxu0 %v30
  %49 = vmatprep.subr.mxu0 0.0
  %50 = vmatpush1.msra.mxu0 %v31
  %51 = vmatprep.subr.mxu0 0.0
  %52 = vmatpush1.msra.mxu0 %v32
  %53 = vmatprep.subr.mxu0 0.0
  %54 = vmatpush1.msra.mxu0 %v33
  %55 = vmatprep.subr.mxu0 0.0
  %56 = vmatpush1.msra.mxu0 %v34
  %57 = vmatprep.subr.mxu0 0.0
  %58 = vmatpush1.msra.mxu0 %v35
  %59 = vmatprep.subr.mxu0 0.0
  %60 = vmatpush1.msra.mxu0 %v36
  %61 = vmatprep.subr.mxu0 0.0
  %62 = vmatpush1.msra.mxu0 %v37
  %63 = vmatprep.subr.mxu0 0.0
  %64 = vmatpush1.msra.mxu0 %v38
  %65 = vmatprep.subr.mxu0 0.0
  %66 = vmatpush1.msra.mxu0 %v39
  %67 = vmatprep.subr.mxu0 0.0
  %68 = vmatpush1.msra.mxu0 %v40
  %69 = vmatprep.subr.mxu0 0.0
  %70 = vmatpush1.msra.mxu0 %v41
  %71 = vmatprep.subr.mxu0 0.0
  %72 = vmatpush1.msra.mxu0 %v42
  %73 = vmatprep.subr.mxu0 0.0
  %74 = vmatpush1.msra.mxu0 %v43
  %75 = vmatprep.subr.mxu0 0.0
  %76 = vmatpush1.msra.mxu0 %v44
  %77 = vmatprep.subr.mxu0 0.0
  %78 = vmatpush1.msra.mxu0 0.0
  %79 = vmatprep.subr.mxu0 0.0
  %80 = vmatpush1.msra.mxu0 0.0
  %81 = vmatprep.subr.mxu0 0.0
  %82 = vmatpush1.msra.mxu0 0.0
  %83 = vmatprep.subr.mxu0 0.0
  %84 = vmatpush1.msra.mxu0 0.0
  %85 = vmatprep.subr.mxu0 0.0
  %86 = vmatpush1.msra.mxu0 0.0
  %87 = vmatprep.subr.mxu0 0.0
  %88 = vmatpush1.msra.mxu0 0.0
  %89 = vmatprep.subr.mxu0 0.0
  %90 = vmatpush1.msra.mxu0 0.0
  %91 = vmatprep.subr.mxu0 0.0
  %92 = vmatpush1.msra.mxu0 0.0
  %93 = vmatprep.subr.mxu0 0.0
  %94 = vmatpush1.msra.mxu0 0.0
  %95 = vmatprep.subr.mxu0 0.0
  %96 = vmatpush1.msra.mxu0 0.0
  %97 = vmatprep.subr.mxu0 0.0
  %98 = vmatpush1.msra.mxu0 0.0
  %99 = vmatprep.subr.mxu0 0.0
  %100 = vmatpush1.msra.mxu0 0.0
  %101 = vmatprep.subr.mxu0 0.0
  %102 = vmatpush1.msra.mxu0 0.0
  %103 = vmatprep.subr.mxu0 0.0
  %104 = vmatpush1.msra.mxu0 0.0
  %105 = vmatprep.subr.mxu0 0.0
  %106 = vmatpush1.msra.mxu0 0.0
  %107 = vmatprep.subr.mxu0 0.0
  %108 = vmatpush1.msra.mxu0 0.0
  %109 = vmatprep.mubr.f32.mxu0 0.0
  %110 = vmatmul.mubr.f32.gmra.mrb[0].mxu0 %v24
  %v111 = vpop.f32.mrb[0].mxu0
  %v112 = vadd.f32 0.0, %v111
  %v113 = vpop.f32.mrb[0].mxu0
  %114 = vmatprep.mubr.f32.mxu0 0.0
  %115 = vmatmul.mubr.f32.gmra.mrb[0].mxu0 %v25
  %v116 = vpop.f32.mrb[0].mxu0
  %v117 = vadd.f32 0.0, %v116
  %v118 = vpop.f32.mrb[0].mxu0
  %119 = vmatprep.mubr.f32.mxu0 0.0
  %120 = vmatmul.mubr.f32.gmra.mrb[0].mxu0 %v26
  %v121 = vpop.f32.mrb[0].mxu0
  %v122 = vadd.f32 0.0, %v121
  %v123 = vpop.f32.mrb[0].mxu0
  %124 = vmatprep.mubr.f32.mxu0 0.0
  %125 = vmatmul.mubr.f32.gmra.mrb[0].mxu0 %v27
  %v126 = vpop.f32.mrb[0].mxu0
  %v127 = vadd.f32 0.0, %v126
  %v128 = vpop.f32.mrb[0].mxu0
  %129 = vdwg.mxu0
  %v130 = vadd.f32 %v112, %v117
  %v131 = vadd.f32 %v130, %v122
  %v132 = vadd.f32 %v131, %v127
  %v133 = vrot.slane %v132, 4
  %v134 = vadd.f32 %v132, %v133
  %v135 = vrot.slane %v134, 2
  %v136 = vadd.f32 %v134, %v135
  %v137 = vrot.slane %v136, 1
  %v138 = vadd.f32 %v136, %v137
  %v139 = vmul.f32 %v24, %v24
  %v140 = vmul.f32 %v25, %v25
  %v141 = vmul.f32 %v26, %v26
  %v142 = vmul.f32 %v27, %v27
  %143 = vmatprep.subr.mxu0 0.0
  %144 = vmatpush1.msra.mxu0 %v29
  %145 = vmatprep.subr.mxu0 0.0
  %146 = vmatpush1.msra.mxu0 %v30
  %147 = vmatprep.subr.mxu0 0.0
  %148 = vmatpush1.msra.mxu0 %v31
  %149 = vmatprep.subr.mxu0 0.0
  %150 = vmatpush1.msra.mxu0 %v32
  %151 = vmatprep.subr.mxu0 0.0
  %152 = vmatpush1.msra.mxu0 %v33
  %153 = vmatprep.subr.mxu0 0.0
  %154 = vmatpush1.msra.mxu0 %v34
  %155 = vmatprep.subr.mxu0 0.0
  %156 = vmatpush1.msra.mxu0 %v35
  %157 = vmatprep.subr.mxu0 0.0
  %158 = vmatpush1.msra.mxu0 %v36
  %159 = vmatprep.subr.mxu0 0.0
  %160 = vmatpush1.msra.mxu0 %v37
  %161 = vmatprep.subr.mxu0 0.0
  %162 = vmatpush1.msra.mxu0 %v38
  %163 = vmatprep.subr.mxu0 0.0
  %164 = vmatpush1.msra.mxu0 %v39
  %165 = vmatprep.subr.mxu0 0.0
  %166 = vmatpush1.msra.mxu0 %v40
  %167 = vmatprep.subr.mxu0 0.0
  %168 = vmatpush1.msra.mxu0 %v41
  %169 = vmatprep.subr.mxu0 0.0
  %170 = vmatpush1.msra.mxu0 %v42
  %171 = vmatprep.subr.mxu0 0.0
  %172 = vmatpush1.msra.mxu0 %v43
  %173 = vmatprep.subr.mxu0 0.0
  %174 = vmatpush1.msra.mxu0 %v44
  %175 = vmatprep.subr.mxu0 0.0
  %176 = vmatpush1.msra.mxu0 0.0
  %177 = vmatprep.subr.mxu0 0.0
  %178 = vmatpush1.msra.mxu0 0.0
  %179 = vmatprep.subr.mxu0 0.0
  %180 = vmatpush1.msra.mxu0 0.0
  %181 = vmatprep.subr.mxu0 0.0
  %182 = vmatpush1.msra.mxu0 0.0
  %183 = vmatprep.subr.mxu0 0.0
  %184 = vmatpush1.msra.mxu0 0.0
  %185 = vmatprep.subr.mxu0 0.0
  %186 = vmatpush1.msra.mxu0 0.0
  %187 = vmatprep.subr.mxu0 0.0
  %188 = vmatpush1.msra.mxu0 0.0
  %189 = vmatprep.subr.mxu0 0.0
  %190 = vmatpush1.msra.mxu0 0.0
  %191 = vmatprep.subr.mxu0 0.0
  %192 = vmatpush1.msra.mxu0 0.0
  %193 = vmatprep.subr.mxu0 0.0
  %194 = vmatpush1.msra.mxu0 0.0
  %195 = vmatprep.subr.mxu0 0.0
  %196 = vmatpush1.msra.mxu0 0.0
  %197 = vmatprep.subr.mxu0 0.0
  %198 = vmatpush1.msra.mxu0 0.0
  %199 = vmatprep.subr.mxu0 0.0
  %200 = vmatpush1.msra.mxu0 0.0
  %201 = vmatprep.subr.mxu0 0.0
  %202 = vmatpush1.msra.mxu0 0.0
  %203 = vmatprep.subr.mxu0 0.0
  %204 = vmatpush1.msra.mxu0 0.0
  %205 = vmatprep.subr.mxu0 0.0
  %206 = vmatpush1.msra.mxu0 0.0
  %207 = vmatprep.mubr.f32.mxu0 0.0
  %208 = vmatmul.mubr.f32.gmra.mrb[0].mxu0 %v139
  %v209 = vpop.f32.mrb[0].mxu0
  %v210 = vadd.f32 0.0, %v209
  %v211 = vpop.f32.mrb[0].mxu0
  %212 = vmatprep.mubr.f32.mxu0 0.0
  %213 = vmatmul.mubr.f32.gmra.mrb[0].mxu0 %v140
  %v214 = vpop.f32.mrb[0].mxu0
  %v215 = vadd.f32 0.0, %v214
  %v216 = vpop.f32.mrb[0].mxu0
  %217 = vmatprep.mubr.f32.mxu0 0.0
  %218 = vmatmul.mubr.f32.gmra.mrb[0].mxu0 %v141
  %v219 = vpop.f32.mrb[0].mxu0
  %v220 = vadd.f32 0.0, %v219
  %v221 = vpop.f32.mrb[0].mxu0
  %222 = vmatprep.mubr.f32.mxu0 0.0
  %223 = vmatmul.mubr.f32.gmra.mrb[0].mxu0 %v142
  %v224 = vpop.f32.mrb[0].mxu0
  %v225 = vadd.f32 0.0, %v224
  %v226 = vpop.f32.mrb[0].mxu0
  %227 = vdwg.mxu0
  %v228 = vadd.f32 %v210, %v215
  %v229 = vadd.f32 %v228, %v220
  %v230 = vadd.f32 %v229, %v225
  %v231 = vrot.slane %v230, 4
  %v232 = vadd.f32 %v230, %v231
  %v233 = vrot.slane %v232, 2
  %v234 = vadd.f32 %v232, %v233
  %v235 = vrot.slane %v234, 1
  %v236 = vadd.f32 %v234, %v235
  %v237 = vrcp.pop 512.0
  %v238 = vmul.f32 %v138, %v237
  %v239 = vmul.f32 %v236, %v237
  %v240 = vmul.f32 %v238, %v238
  %v241 = vsub.f32 %v239, %v240
  %v242 = vmax.f32 %v241, 0.0
  %v243 = vadd.f32 %v242, 1e-05
  %v244 = vrsqrt.pop %v243
  %v245 = vmul.f32 %v28, %v244
  %v246 = vmul.f32 %v238, %v245
  %v248 = vrot.slane %v246, 7
  %v250 = vsub.f32 %v28, %v248
  %v251 = vlaneseq
  %v252 = vshrl.u32 %v251, 7
  %v253 = vsub.s32 0, %v252
  %v254 = vrot.slane %v245, %v253
  %v255 = vmul.f32 %v24, %v254
  %v256 = vmul.f32 %v25, %v254
  %v257 = vmul.f32 %v26, %v254
  %v258 = vmul.f32 %v27, %v254
  %v259 = vlaneseq
  %v260 = vshrl.u32 %v259, 7
  %v261 = vsub.s32 1, %v260
  %v262 = vrot.slane %v250, %v261
  %v263 = vadd.f32 %v255, %v262
  %v264 = vadd.f32 %v256, %v262
  %v265 = vadd.f32 %v257, %v262
  %v266 = vadd.f32 %v258, %v262
  %v267 = vmax.f32 %v263, 0.0
  %v268 = vmax.f32 %v264, 0.0
  %v269 = vmax.f32 %v265, 0.0
  %v270 = vmax.f32 %v266, 0.0
  %271 = vst [vmem:[#allocation2] sm:$0xff] 0
  %272 = vst [vmem:[#allocation2 + $0x8] sm:$0xff] 0
  %273 = vst [vmem:[#allocation2 + $0x10] sm:$0xff] 0
  %274 = vst [vmem:[#allocation2 + $0x18] sm:$0xff] 0
  %v275 = vpack.c.bf16 %v268, %v267
  %v276 = vpack.c.bf16 %v270, %v269
  %v278 = vshrl.u32 %v275, 16
  %v280 = vrot.slane %v278, 7
  %v281 = vshll.u32 %v275, 16
  %v283 = vor.u32 %v280, %v281
  %v285 = vshrl.u32 %v276, 16
  %v287 = vrot.slane %v285, 7
  %v288 = vshll.u32 %v276, 16
  %v290 = vor.u32 %v287, %v288
  %vm295 = vcmask 1047552
  %vm296 = vsmask.f32 7938
  %vm297 = vmand %vm295, %vm296
  %v298 = vld [vmem:[#allocation2] sm:$0xff]
  %v299 = vsel %vm297, %v283, %v298
  %300 = vst [vmem:[#allocation2] sm:$0xff] %v299
  %vm301 = vcmask 1040384
  %vm302 = vsmask.f32 256
  %vm303 = vmand %vm301, %vm302
  %v304 = vld [vmem:[#allocation2 + $0x8] sm:$0x1]
  %v305 = vsel %vm303, %v280, %v304
  %306 = vst [vmem:[#allocation2 + $0x8] sm:$0x1] %v305
  %v307 = vld [vmem:[#allocation2 + $0x10] sm:$0xff]
  %v308 = vsel %vm297, %v290, %v307
  %309 = vst [vmem:[#allocation2 + $0x10] sm:$0xff] %v308
  %v310 = vld [vmem:[#allocation2 + $0x18] sm:$0x1]
  %v311 = vsel %vm303, %v287, %v310
  %312 = vst [vmem:[#allocation2 + $0x18] sm:$0x1] %v311
  %v313 = vld [vmem:[#allocation2] sm:$0xff]
  %v314 = vld [vmem:[#allocation2 + $0x10] sm:$0xff]
  %v315 = vld [vmem:[#allocation2] sm:$0xff]
  %v316 = vld [vmem:[#allocation2 + $0x8] sm:$0x1]
  %v317 = vld [vmem:[#allocation2 + $0x10] sm:$0xff]
  %v318 = vld [vmem:[#allocation2 + $0x18] sm:$0x1]
  %vm319 = vsmask.f32 7424
  %v321 = vshrl.u32 %v315, 16
  %v323 = vshll.u32 %v315, 16
  %v325 = vrot.slane %v323, 1
  %v326 = vor.u32 %v321, %v325
  %v328 = vshll.u32 %v316, 16
  %v330 = vrot.slane %v328, 1
  %v331 = vsel %vm319, %v326, %v330
  %v333 = vshrl.u32 %v317, 16
  %v335 = vshll.u32 %v317, 16
  %v337 = vrot.slane %v335, 1
  %v338 = vor.u32 %v333, %v337
  %v340 = vshll.u32 %v318, 16
  %v342 = vrot.slane %v340, 1
  %v343 = vsel %vm319, %v338, %v342
  %v346 = vld [vmem:[#allocation2] sm:$0xfe]
  %v347 = vld [vmem:[#allocation2 + $0x10] sm:$0xfe]
  %vm352 = vcmask 1046528
  %v353 = vrot.slane %v346, 1
  %v354 = vrot.slane %v316, 1
  %v355 = vsel %vm352, %v353, %v354
  %v356 = vrot.slane %v347, 1
  %v357 = vrot.slane %v318, 1
  %v358 = vsel %vm352, %v356, %v357
  %v361 = vld [vmem:[%s1] sm:$0xf]
  %v362 = vld [vmem:[%s1 + $0x4] sm:$0xf]
  %v363 = vld [vmem:[%s1 + $0x8] sm:$0xf]
  %v364 = vld [vmem:[%s1 + $0xc] sm:$0xf]
  %v365 = vld [vmem:[%s1 + $0x10] sm:$0xf]
  %v366 = vld [vmem:[%s1 + $0x14] sm:$0xf]
  %v367 = vld [vmem:[%s1 + $0x18] sm:$0xf]
  %v368 = vld [vmem:[%s1 + $0x1c] sm:$0xf]
  %v369 = vld [vmem:[%s1 + $0x20] sm:$0xf]
  %v370 = vld [vmem:[%s1 + $0x24] sm:$0xf]
  %v371 = vld [vmem:[%s1 + $0x28] sm:$0xf]
  %v372 = vld [vmem:[%s1 + $0x2c] sm:$0xf]
  %v373 = vld [vmem:[%s1 + $0x30] sm:$0xf]
  %v374 = vld [vmem:[%s1 + $0x34] sm:$0xf]
  %v375 = vld [vmem:[%s1 + $0x38] sm:$0xf]
  %v376 = vld [vmem:[%s1 + $0x3c] sm:$0xf]
  %v377 = vld [vmem:[%s1 + $0x40] sm:$0xf]
  %v378 = vld [vmem:[%s1 + $0x44] sm:$0xf]
  %v379 = vld [vmem:[%s1 + $0x48] sm:$0xf]
  %v380 = vld [vmem:[%s1 + $0x4c] sm:$0xf]
  %v381 = vld [vmem:[%s1 + $0x50] sm:$0xf]
  %v382 = vld [vmem:[%s1 + $0x54] sm:$0xf]
  %v383 = vld [vmem:[%s1 + $0x58] sm:$0xf]
  %v384 = vld [vmem:[%s1 + $0x5c] sm:$0xf]
  %v385 = vld [vmem:[%s1 + $0x60] sm:$0xf]
  %v386 = vld [vmem:[%s1 + $0x64] sm:$0xf]
  %v387 = vld [vmem:[%s1 + $0x68] sm:$0xf]
  %v388 = vld [vmem:[%s1 + $0x6c] sm:$0xf]
  %v389 = vld [vmem:[%s1 + $0x70] sm:$0xf]
  %v390 = vld [vmem:[%s1 + $0x74] sm:$0xf]
  %v391 = vld [vmem:[%s1 + $0x78] sm:$0xf]
  %v392 = vld [vmem:[%s1 + $0x7c] sm:$0xf]
  %v393 = vld [vmem:[%s1 + $0x80] sm:$0xf]
  %v394 = vld [vmem:[%s1 + $0x84] sm:$0xf]
  %v395 = vld [vmem:[%s1 + $0x88] sm:$0xf]
  %v396 = vld [vmem:[%s1 + $0x8c] sm:$0xf]
  %v397 = vld [vmem:[%s1 + $0x90] sm:$0xf]
  %v398 = vld [vmem:[%s1 + $0x94] sm:$0xf]
  %v399 = vld [vmem:[%s1 + $0x98] sm:$0xf]
  %v400 = vld [vmem:[%s1 + $0x9c] sm:$0xf]
  %v401 = vld [vmem:[%s1 + $0xa0] sm:$0xf]
  %v402 = vld [vmem:[%s1 + $0xa4] sm:$0xf]
  %v403 = vld [vmem:[%s1 + $0xa8] sm:$0xf]
  %v404 = vld [vmem:[%s1 + $0xac] sm:$0xf]
  %v405 = vld [vmem:[%s1 + $0xb0] sm:$0xf]
  %v406 = vld [vmem:[%s1 + $0xb4] sm:$0xf]
  %v407 = vld [vmem:[%s1 + $0xb8] sm:$0xf]
  %v408 = vld [vmem:[%s1 + $0xbc] sm:$0xf]
  %v457 = vunpack.c.l.b16 %v361
  %v458 = vunpack.c.l.b16 %v362
  %v459 = vunpack.c.l.b16 %v363
  %v460 = vunpack.c.l.b16 %v364
  %v461 = vunpack.c.l.b16 %v365
  %v462 = vunpack.c.l.b16 %v366
  %v463 = vunpack.c.l.b16 %v367
  %v464 = vunpack.c.l.b16 %v368
  %v465 = vunpack.c.l.b16 %v369
  %v466 = vunpack.c.l.b16 %v370
  %v467 = vunpack.c.l.b16 %v371
  %v468 = vunpack.c.l.b16 %v372
  %v469 = vunpack.c.l.b16 %v373
  %v470 = vunpack.c.l.b16 %v374
  %v471 = vunpack.c.l.b16 %v375
  %v472 = vunpack.c.l.b16 %v376
  %v473 = vunpack.c.l.b16 %v377
  %v474 = vunpack.c.l.b16 %v378
  %v475 = vunpack.c.l.b16 %v379
  %v476 = vunpack.c.l.b16 %v380
  %v477 = vunpack.c.l.b16 %v381
  %v478 = vunpack.c.l.b16 %v382
  %v479 = vunpack.c.l.b16 %v383
  %v480 = vunpack.c.l.b16 %v384
  %v481 = vunpack.c.l.b16 %v385
  %v482 = vunpack.c.l.b16 %v386
  %v483 = vunpack.c.l.b16 %v387
  %v484 = vunpack.c.l.b16 %v388
  %v485 = vunpack.c.l.b16 %v389
  %v486 = vunpack.c.l.b16 %v390
  %v487 = vunpack.c.l.b16 %v391
  %v488 = vunpack.c.l.b16 %v392
  %v489 = vunpack.c.l.b16 %v393
  %v490 = vunpack.c.l.b16 %v394
  %v491 = vunpack.c.l.b16 %v395
  %v492 = vunpack.c.l.b16 %v396
  %v493 = vunpack.c.l.b16 %v397
  %v494 = vunpack.c.l.b16 %v398
  %v495 = vunpack.c.l.b16 %v399
  %v496 = vunpack.c.l.b16 %v400
  %v497 = vunpack.c.l.b16 %v401
  %v498 = vunpack.c.l.b16 %v402
  %v499 = vunpack.c.l.b16 %v403
  %v500 = vunpack.c.l.b16 %v404
  %v501 = vunpack.c.l.b16 %v405
  %v502 = vunpack.c.l.b16 %v406
  %v503 = vunpack.c.l.b16 %v407
  %v504 = vunpack.c.l.b16 %v408
  %v505 = vpack.c.b16 %v458, %v457
  %v506 = vpack.c.b16 %v460, %v459
  %v507 = vpack.c.b16 %v462, %v461
  %v508 = vpack.c.b16 %v464, %v463
  %v509 = vpack.c.b16 %v466, %v465
  %v510 = vpack.c.b16 %v468, %v467
  %v511 = vpack.c.b16 %v470, %v469
  %v512 = vpack.c.b16 %v472, %v471
  %v513 = vpack.c.b16 %v474, %v473
  %v514 = vpack.c.b16 %v476, %v475
  %v515 = vpack.c.b16 %v478, %v477
  %v516 = vpack.c.b16 %v480, %v479
  %v517 = vpack.c.b16 %v482, %v481
  %v518 = vpack.c.b16 %v484, %v483
  %v519 = vpack.c.b16 %v486, %v485
  %v520 = vpack.c.b16 %v488, %v487
  %v521 = vpack.c.b16 %v490, %v489
  %v522 = vpack.c.b16 %v492, %v491
  %v523 = vpack.c.b16 %v494, %v493
  %v524 = vpack.c.b16 %v496, %v495
  %v525 = vpack.c.b16 %v498, %v497
  %v526 = vpack.c.b16 %v500, %v499
  %v527 = vpack.c.b16 %v502, %v501
  %v528 = vpack.c.b16 %v504, %v503
  %553 = vmatprep.subr.bf16.mxu0 0
  %554 = vmatpush1.bf16.msra.mxu0 %v505
  %555 = vmatprep.subr.bf16.mxu0 0
  %556 = vmatpush1.bf16.msra.mxu0 %v506
  %557 = vmatprep.subr.bf16.mxu0 0
  %558 = vmatpush1.bf16.msra.mxu0 %v507
  %559 = vmatprep.subr.bf16.mxu0 0
  %560 = vmatpush1.bf16.msra.mxu0 %v508
  %561 = vmatprep.subr.bf16.mxu0 0
  %562 = vmatpush1.bf16.msra.mxu0 %v509
  %563 = vmatprep.subr.bf16.mxu0 0
  %564 = vmatpush1.bf16.msra.mxu0 %v510
  %565 = vmatprep.subr.bf16.mxu0 0
  %566 = vmatpush1.bf16.msra.mxu0 %v511
  %567 = vmatprep.subr.bf16.mxu0 0
  %568 = vmatpush1.bf16.msra.mxu0 %v512
  %569 = vmatprep.subr.bf16.mxu0 0
  %570 = vmatpush1.bf16.msra.mxu0 %v513
  %571 = vmatprep.subr.bf16.mxu0 0
  %572 = vmatpush1.bf16.msra.mxu0 %v514
  %573 = vmatprep.subr.bf16.mxu0 0
  %574 = vmatpush1.bf16.msra.mxu0 %v515
  %575 = vmatprep.subr.bf16.mxu0 0
  %576 = vmatpush1.bf16.msra.mxu0 %v516
  %577 = vmatprep.subr.bf16.mxu0 0
  %578 = vmatpush1.bf16.msra.mxu0 %v517
  %579 = vmatprep.subr.bf16.mxu0 0
  %580 = vmatpush1.bf16.msra.mxu0 %v518
  %581 = vmatprep.subr.bf16.mxu0 0
  %582 = vmatpush1.bf16.msra.mxu0 %v519
  %583 = vmatprep.subr.bf16.mxu0 0
  %584 = vmatpush1.bf16.msra.mxu0 %v520
  %585 = vmatprep.mubr.bf16.mxu0 %v331
  %586 = vmatmul.mubr.bf16.gmra.mrb[0].mxu0 %v313
  %v587 = vpop.f32.mrb[0].mxu0
  %v588 = vadd.f32 0.0, %v587
  %v589 = vpop.f32.mrb[0].mxu0
  %v590 = vpop.f32.mrb[0].mxu0
  %v591 = vadd.f32 0.0, %v590
  %v592 = vpop.f32.mrb[0].mxu0
  %593 = vmatprep.mubr.bf16.mxu0 %v343
  %594 = vmatmul.mubr.bf16.gmra.mrb[0].mxu0 %v314
  %v595 = vpop.f32.mrb[0].mxu0
  %v596 = vadd.f32 0.0, %v595
  %v597 = vpop.f32.mrb[0].mxu0
  %v598 = vpop.f32.mrb[0].mxu0
  %v599 = vadd.f32 0.0, %v598
  %v600 = vpop.f32.mrb[0].mxu0
  %601 = vdwg.mxu0
  %602 = vmatprep.subr.bf16.mxu0 0
  %603 = vmatpush1.bf16.msra.mxu0 %v521
  %604 = vmatprep.subr.bf16.mxu0 0
  %605 = vmatpush1.bf16.msra.mxu0 %v522
  %606 = vmatprep.subr.bf16.mxu0 0
  %607 = vmatpush1.bf16.msra.mxu0 %v523
  %608 = vmatprep.subr.bf16.mxu0 0
  %609 = vmatpush1.bf16.msra.mxu0 %v524
  %610 = vmatprep.subr.bf16.mxu0 0
  %611 = vmatpush1.bf16.msra.mxu0 %v525
  %612 = vmatprep.subr.bf16.mxu0 0
  %613 = vmatpush1.bf16.msra.mxu0 %v526
  %614 = vmatprep.subr.bf16.mxu0 0
  %615 = vmatpush1.bf16.msra.mxu0 %v527
  %616 = vmatprep.subr.bf16.mxu0 0
  %617 = vmatpush1.bf16.msra.mxu0 %v528
  %618 = vmatprep.subr.bf16.mxu0 0
  %619 = vmatpush1.bf16.msra.mxu0 0
  %620 = vmatprep.subr.bf16.mxu0 0
  %621 = vmatpush1.bf16.msra.mxu0 0
  %622 = vmatprep.subr.bf16.mxu0 0
  %623 = vmatpush1.bf16.msra.mxu0 0
  %624 = vmatprep.subr.bf16.mxu0 0
  %625 = vmatpush1.bf16.msra.mxu0 0
  %626 = vmatprep.subr.bf16.mxu0 0
  %627 = vmatpush1.bf16.msra.mxu0 0
  %628 = vmatprep.subr.bf16.mxu0 0
  %629 = vmatpush1.bf16.msra.mxu0 0
  %630 = vmatprep.subr.bf16.mxu0 0
  %631 = vmatpush1.bf16.msra.mxu0 0
  %632 = vmatprep.subr.bf16.mxu0 0
  %633 = vmatpush1.bf16.msra.mxu0 0
  %634 = vmatprep.mubr.bf16.mxu0 0
  %635 = vmatmul.mubr.bf16.gmra.mrb[0].mxu0 %v355
  %v636 = vpop.f32.mrb[0].mxu0
  %v637 = vadd.f32 %v588, %v636
  %v638 = vpop.f32.mrb[0].mxu0
  %v639 = vpop.f32.mrb[0].mxu0
  %v640 = vadd.f32 %v591, %v639
  %v641 = vpop.f32.mrb[0].mxu0
  %642 = vmatprep.mubr.bf16.mxu0 0
  %643 = vmatmul.mubr.bf16.gmra.mrb[0].mxu0 %v358
  %v644 = vpop.f32.mrb[0].mxu0
  %v645 = vadd.f32 %v596, %v644
  %v646 = vpop.f32.mrb[0].mxu0
  %v647 = vpop.f32.mrb[0].mxu0
  %v648 = vadd.f32 %v599, %v647
  %v649 = vpop.f32.mrb[0].mxu0
  %650 = vdwg.mxu0
  %v651 = vld [vmem:[%s5] sm:$0x3]
  %v652 = vld [vmem:[%s4] sm:$0xff]
  %v653 = vld [vmem:[%s4 + $0x8] sm:$0xff]
  %v654 = vld [vmem:[%s4 + $0x10] sm:$0xff]
  %v655 = vld [vmem:[%s4 + $0x18] sm:$0xff]
  %v656 = vld [vmem:[%s4 + $0x20] sm:$0xff]
  %v657 = vld [vmem:[%s4 + $0x28] sm:$0xff]
  %v658 = vld [vmem:[%s4 + $0x30] sm:$0xff]
  %v659 = vld [vmem:[%s4 + $0x38] sm:$0xff]
  %v660 = vld [vmem:[%s4 + $0x40] sm:$0xff]
  %v661 = vld [vmem:[%s4 + $0x48] sm:$0xff]
  %v662 = vld [vmem:[%s4 + $0x50] sm:$0xff]
  %v663 = vld [vmem:[%s4 + $0x58] sm:$0xff]
  %v664 = vld [vmem:[%s4 + $0x60] sm:$0xff]
  %v665 = vld [vmem:[%s4 + $0x68] sm:$0xff]
  %v666 = vld [vmem:[%s4 + $0x70] sm:$0xff]
  %v667 = vld [vmem:[%s4 + $0x78] sm:$0xff]
  %668 = vmatprep.subr.mxu0 0.0
  %669 = vmatpush1.msra.mxu0 %v652
  %670 = vmatprep.subr.mxu0 0.0
  %671 = vmatpush1.msra.mxu0 %v653
  %672 = vmatprep.subr.mxu0 0.0
  %673 = vmatpush1.msra.mxu0 %v654
  %674 = vmatprep.subr.mxu0 0.0
  %675 = vmatpush1.msra.mxu0 %v655
  %676 = vmatprep.subr.mxu0 0.0
  %677 = vmatpush1.msra.mxu0 %v656
  %678 = vmatprep.subr.mxu0 0.0
  %679 = vmatpush1.msra.mxu0 %v657
  %680 = vmatprep.subr.mxu0 0.0
  %681 = vmatpush1.msra.mxu0 %v658
  %682 = vmatprep.subr.mxu0 0.0
  %683 = vmatpush1.msra.mxu0 %v659
  %684 = vmatprep.subr.mxu0 0.0
  %685 = vmatpush1.msra.mxu0 %v660
  %686 = vmatprep.subr.mxu0 0.0
  %687 = vmatpush1.msra.mxu0 %v661
  %688 = vmatprep.subr.mxu0 0.0
  %689 = vmatpush1.msra.mxu0 %v662
  %690 = vmatprep.subr.mxu0 0.0
  %691 = vmatpush1.msra.mxu0 %v663
  %692 = vmatprep.subr.mxu0 0.0
  %693 = vmatpush1.msra.mxu0 %v664
  %694 = vmatprep.subr.mxu0 0.0
  %695 = vmatpush1.msra.mxu0 %v665
  %696 = vmatprep.subr.mxu0 0.0
  %697 = vmatpush1.msra.mxu0 %v666
  %698 = vmatprep.subr.mxu0 0.0
  %699 = vmatpush1.msra.mxu0 %v667
  %700 = vmatprep.subr.mxu0 0.0
  %701 = vmatpush1.msra.mxu0 0.0
  %702 = vmatprep.subr.mxu0 0.0
  %703 = vmatpush1.msra.mxu0 0.0
  %704 = vmatprep.subr.mxu0 0.0
  %705 = vmatpush1.msra.mxu0 0.0
  %706 = vmatprep.subr.mxu0 0.0
  %707 = vmatpush1.msra.mxu0 0.0
  %708 = vmatprep.subr.mxu0 0.0
  %709 = vmatpush1.msra.mxu0 0.0
  %710 = vmatprep.subr.mxu0 0.0
  %711 = vmatpush1.msra.mxu0 0.0
  %712 = vmatprep.subr.mxu0 0.0
  %713 = vmatpush1.msra.mxu0 0.0
  %714 = vmatprep.subr.mxu0 0.0
  %715 = vmatpush1.msra.mxu0 0.0
  %716 = vmatprep.subr.mxu0 0.0
  %717 = vmatpush1.msra.mxu0 0.0
  %718 = vmatprep.subr.mxu0 0.0
  %719 = vmatpush1.msra.mxu0 0.0
  %720 = vmatprep.subr.mxu0 0.0
  %721 = vmatpush1.msra.mxu0 0.0
  %722 = vmatprep.subr.mxu0 0.0
  %723 = vmatpush1.msra.mxu0 0.0
  %724 = vmatprep.subr.mxu0 0.0
  %725 = vmatpush1.msra.mxu0 0.0
  %726 = vmatprep.subr.mxu0 0.0
  %727 = vmatpush1.msra.mxu0 0.0
  %728 = vmatprep.subr.mxu0 0.0
  %729 = vmatpush1.msra.mxu0 0.0
  %730 = vmatprep.subr.mxu0 0.0
  %731 = vmatpush1.msra.mxu0 0.0
  %732 = vmatprep.mubr.f32.mxu0 0.0
  %733 = vmatmul.mubr.f32.gmra.mrb[0].mxu0 %v637
  %v734 = vpop.f32.mrb[0].mxu0
  %v735 = vadd.f32 0.0, %v734
  %v736 = vpop.f32.mrb[0].mxu0
  %737 = vmatprep.mubr.f32.mxu0 0.0
  %738 = vmatmul.mubr.f32.gmra.mrb[0].mxu0 %v640
  %v739 = vpop.f32.mrb[0].mxu0
  %v740 = vadd.f32 0.0, %v739
  %v741 = vpop.f32.mrb[0].mxu0
  %742 = vmatprep.mubr.f32.mxu0 0.0
  %743 = vmatmul.mubr.f32.gmra.mrb[0].mxu0 %v645
  %v744 = vpop.f32.mrb[0].mxu0
  %v745 = vadd.f32 0.0, %v744
  %v746 = vpop.f32.mrb[0].mxu0
  %747 = vmatprep.mubr.f32.mxu0 0.0
  %748 = vmatmul.mubr.f32.gmra.mrb[0].mxu0 %v648
  %v749 = vpop.f32.mrb[0].mxu0
  %v750 = vadd.f32 0.0, %v749
  %v751 = vpop.f32.mrb[0].mxu0
  %752 = vdwg.mxu0
  %v753 = vadd.f32 %v735, %v740
  %v754 = vadd.f32 %v753, %v745
  %v755 = vadd.f32 %v754, %v750
  %v756 = vrot.slane %v755, 4
  %v757 = vadd.f32 %v755, %v756
  %v758 = vrot.slane %v757, 2
  %v759 = vadd.f32 %v757, %v758
  %v760 = vrot.slane %v759, 1
  %v761 = vadd.f32 %v759, %v760
  %v762 = vmul.f32 %v637, %v637
  %v763 = vmul.f32 %v640, %v640
  %v764 = vmul.f32 %v645, %v645
  %v765 = vmul.f32 %v648, %v648
  %766 = vmatprep.subr.mxu0 0.0
  %767 = vmatpush1.msra.mxu0 %v652
  %768 = vmatprep.subr.mxu0 0.0
  %769 = vmatpush1.msra.mxu0 %v653
  %770 = vmatprep.subr.mxu0 0.0
  %771 = vmatpush1.msra.mxu0 %v654
  %772 = vmatprep.subr.mxu0 0.0
  %773 = vmatpush1.msra.mxu0 %v655
  %774 = vmatprep.subr.mxu0 0.0
  %775 = vmatpush1.msra.mxu0 %v656
  %776 = vmatprep.subr.mxu0 0.0
  %777 = vmatpush1.msra.mxu0 %v657
  %778 = vmatprep.subr.mxu0 0.0
  %779 = vmatpush1.msra.mxu0 %v658
  %780 = vmatprep.subr.mxu0 0.0
  %781 = vmatpush1.msra.mxu0 %v659
  %782 = vmatprep.subr.mxu0 0.0
  %783 = vmatpush1.msra.mxu0 %v660
  %784 = vmatprep.subr.mxu0 0.0
  %785 = vmatpush1.msra.mxu0 %v661
  %786 = vmatprep.subr.mxu0 0.0
  %787 = vmatpush1.msra.mxu0 %v662
  %788 = vmatprep.subr.mxu0 0.0
  %789 = vmatpush1.msra.mxu0 %v663
  %790 = vmatprep.subr.mxu0 0.0
  %791 = vmatpush1.msra.mxu0 %v664
  %792 = vmatprep.subr.mxu0 0.0
  %793 = vmatpush1.msra.mxu0 %v665
  %794 = vmatprep.subr.mxu0 0.0
  %795 = vmatpush1.msra.mxu0 %v666
  %796 = vmatprep.subr.mxu0 0.0
  %797 = vmatpush1.msra.mxu0 %v667
  %798 = vmatprep.subr.mxu0 0.0
  %799 = vmatpush1.msra.mxu0 0.0
  %800 = vmatprep.subr.mxu0 0.0
  %801 = vmatpush1.msra.mxu0 0.0
  %802 = vmatprep.subr.mxu0 0.0
  %803 = vmatpush1.msra.mxu0 0.0
  %804 = vmatprep.subr.mxu0 0.0
  %805 = vmatpush1.msra.mxu0 0.0
  %806 = vmatprep.subr.mxu0 0.0
  %807 = vmatpush1.msra.mxu0 0.0
  %808 = vmatprep.subr.mxu0 0.0
  %809 = vmatpush1.msra.mxu0 0.0
  %810 = vmatprep.subr.mxu0 0.0
  %811 = vmatpush1.msra.mxu0 0.0
  %812 = vmatprep.subr.mxu0 0.0
  %813 = vmatpush1.msra.mxu0 0.0
  %814 = vmatprep.subr.mxu0 0.0
  %815 = vmatpush1.msra.mxu0 0.0
  %816 = vmatprep.subr.mxu0 0.0
  %817 = vmatpush1.msra.mxu0 0.0
  %818 = vmatprep.subr.mxu0 0.0
  %819 = vmatpush1.msra.mxu0 0.0
  %820 = vmatprep.subr.mxu0 0.0
  %821 = vmatpush1.msra.mxu0 0.0
  %822 = vmatprep.subr.mxu0 0.0
  %823 = vmatpush1.msra.mxu0 0.0
  %824 = vmatprep.subr.mxu0 0.0
  %825 = vmatpush1.msra.mxu0 0.0
  %826 = vmatprep.subr.mxu0 0.0
  %827 = vmatpush1.msra.mxu0 0.0
  %828 = vmatprep.subr.mxu0 0.0
  %829 = vmatpush1.msra.mxu0 0.0
  %830 = vmatprep.mubr.f32.mxu0 0.0
  %831 = vmatmul.mubr.f32.gmra.mrb[0].mxu0 %v762
  %v832 = vpop.f32.mrb[0].mxu0
  %v833 = vadd.f32 0.0, %v832
  %v834 = vpop.f32.mrb[0].mxu0
  %835 = vmatprep.mubr.f32.mxu0 0.0
  %836 = vmatmul.mubr.f32.gmra.mrb[0].mxu0 %v763
  %v837 = vpop.f32.mrb[0].mxu0
  %v838 = vadd.f32 0.0, %v837
  %v839 = vpop.f32.mrb[0].mxu0
  %840 = vmatprep.mubr.f32.mxu0 0.0
  %841 = vmatmul.mubr.f32.gmra.mrb[0].mxu0 %v764
  %v842 = vpop.f32.mrb[0].mxu0
  %v843 = vadd.f32 0.0, %v842
  %v844 = vpop.f32.mrb[0].mxu0
  %845 = vmatprep.mubr.f32.mxu0 0.0
  %846 = vmatmul.mubr.f32.gmra.mrb[0].mxu0 %v765
  %v847 = vpop.f32.mrb[0].mxu0
  %v848 = vadd.f32 0.0, %v847
  %v849 = vpop.f32.mrb[0].mxu0
  %850 = vdwg.mxu0
  %v851 = vadd.f32 %v833, %v838
  %v852 = vadd.f32 %v851, %v843
  %v853 = vadd.f32 %v852, %v848
  %v854 = vrot.slane %v853, 4
  %v855 = vadd.f32 %v853, %v854
  %v856 = vrot.slane %v855, 2
  %v857 = vadd.f32 %v855, %v856
  %v858 = vrot.slane %v857, 1
  %v859 = vadd.f32 %v857, %v858
  %v860 = vmul.f32 %v761, %v237
  %v861 = vmul.f32 %v859, %v237
  %v862 = vmul.f32 %v860, %v860
  %v863 = vsub.f32 %v861, %v862
  %v864 = vmax.f32 %v863, 0.0
  %v865 = vadd.f32 %v864, 1e-05
  %v866 = vrsqrt.pop %v865
  %v867 = vmul.f32 %v651, %v866
  %v868 = vmul.f32 %v860, %v867
  %v870 = vrot.slane %v868, 7
  %v872 = vsub.f32 %v651, %v870
  %v873 = vlaneseq
  %v874 = vshrl.u32 %v873, 7
  %v875 = vsub.s32 0, %v874
  %v876 = vrot.slane %v867, %v875
  %v877 = vmul.f32 %v637, %v876
  %v878 = vmul.f32 %v640, %v876
  %v879 = vmul.f32 %v645, %v876
  %v880 = vmul.f32 %v648, %v876
  %v881 = vlaneseq
  %v882 = vshrl.u32 %v881, 7
  %v883 = vsub.s32 1, %v882
  %v884 = vrot.slane %v872, %v883
  %v885 = vadd.f32 %v877, %v884
  %v886 = vadd.f32 %v878, %v884
  %v887 = vadd.f32 %v879, %v884
  %v888 = vadd.f32 %v880, %v884
  %v889 = vmax.f32 %v885, 0.0
  %v890 = vmax.f32 %v886, 0.0
  %v891 = vmax.f32 %v887, 0.0
  %v892 = vmax.f32 %v888, 0.0
  %893 = vst [vmem:[%s6] sm:$0xff] %v889
  %894 = vst [vmem:[%s6 + $0x8] sm:$0xff] %v890
  %895 = vst [vmem:[%s6 + $0x10] sm:$0xff] %v891
  %896 = vst [vmem:[%s6 + $0x18] sm:$0xff] %v892
  // Predicated region
  $region26: #{conv_past_future_forward.3} parent=0 // pred_check
    _
  $region27: #{conv_past_future_forward.3} parent=0 // pred_check_branch
    %898 = sbr.rel (0) target = $region29
  $region28: #{conv_past_future_forward.3} parent=0 // pred_region
    _
  $region29: #{conv_past_future_forward.3} parent=0 // pred_fallthru
    _
  // Predicated region
  $region30: #{conv_past_future_forward.3} parent=0 // pred_check
    _
  $region31: #{conv_past_future_forward.3} parent=0 // pred_check_branch
    %900 = sbr.rel (0) target = $region33
  $region32: #{conv_past_future_forward.3} parent=0 // pred_region
    _
  $region33: #{conv_past_future_forward.3} parent=0 // pred_fallthru
    _

</llo_original>
